<compile_context>
chip_gen: v6e
topology: v6e:2x2x1
jax: 0.10.0
libtpu: 0.0.40
codegen_flags: <defaults>
</compile_context>

<pallas_src>
import jax
import jax.numpy as jnp
from jax.experimental import pallas as pl
from jax.experimental.pallas import tpu as pltpu


_LANE = 128      # lane-dense last dim for weights / hidden activations
_SUBLANE = 8     # row-tile multiple


def _round_up(v, m):
    return (v + m - 1) // m * m


def _pad2d(a, rows, cols):
    r, c = a.shape
    if r == rows and c == cols:
        return a
    return jnp.pad(a, ((0, rows - r), (0, cols - c)))


# --------------------------------------------------------------------------
# Kernel: all layers fused; the row tile of activations stays in VMEM/vregs.
# --------------------------------------------------------------------------
def _make_fused_kernel(num_layers):
    def kernel(*refs):
        x_ref = refs[0]
        o_ref = refs[-1]
        w_refs = refs[1:-1]          # 4 refs per layer: w1, b1, w2', b2'
        h = x_ref[...]
        for i in range(num_layers):
            w1, b1, w2, b2 = w_refs[4 * i:4 * i + 4]
            # Linear 1 + ReLU (MXU matmul, f32 accumulation)
            h = jnp.dot(h.astype(w1.dtype), w1[...],
                        preferred_element_type=jnp.float32) + b1[...]
            h = jnp.maximum(h, 0.0)
            # Linear 2 (BatchNorm eval-affine pre-folded into w2/b2)
            h = jnp.dot(h.astype(w2.dtype), w2[...],
                        preferred_element_type=jnp.float32) + b2[...]
            if i != num_layers - 1:
                h = jnp.maximum(h, 0.0)
            # dropout: identity in eval mode
        o_ref[...] = h[:, :o_ref.shape[-1]].astype(o_ref.dtype)

    return kernel


# --------------------------------------------------------------------------
# One-time parameter preparation (fold BN, pad hidden dim to 128, cast).
# --------------------------------------------------------------------------
def prepare_params(params, num_gc_layers, compute_dtype=jnp.bfloat16):
    weights = []
    hidden_dim = params[0][2].shape[1]
    for li in range(num_gc_layers):
        w1, b1, w2, b2, scale, shift = params[li]
        d_in, h = w1.shape
        hp = _round_up(h, _LANE)
        d_in_p = d_in if li == 0 else _round_up(d_in, _LANE)
        w2f = w2 * scale                           # BN eval: scale columns
        b2f = b2 * scale + shift
        weights += [
            _pad2d(w1, d_in_p, hp).astype(compute_dtype),
            _pad2d(b1, 1, hp).astype(jnp.float32),
            _pad2d(w2f, hp, hp).astype(compute_dtype),
            _pad2d(b2f, 1, hp).astype(jnp.float32),
        ]
    return {
        "weights": tuple(weights),
        "num_layers": num_gc_layers,
        "hidden_dim": hidden_dim,
    }


# --------------------------------------------------------------------------
# Forward wrapper.
# --------------------------------------------------------------------------
def _forward_impl(x, prepped, *, tm, single_buffer_weights):
    weights = prepped["weights"]
    num_layers = prepped["num_layers"]
    H = prepped["hidden_dim"]
    Hp = _round_up(H, _LANE)
    N, Din = x.shape

    # Row-tile choice: large tiles when feature dims are narrow (amortize the
    # ~0.35us/grid-step overhead), but always aim for >= 2 grid steps so the
    # "parallel" axis can shard across 2 TensorCores (v7x).
    if tm is None:
        tm = 512 if max(_round_up(Din, _LANE), Hp) <= _LANE else 256
    tm_eff = max(_SUBLANE, min(tm, _round_up(pl.cdiv(N, 2), _SUBLANE)))
    grid = (pl.cdiv(N, tm_eff),)

    # Constant-index weight blocks: single-buffer them (double-buffering a
    # block whose index_map never changes only wastes VMEM).
    w_kwargs = (dict(pipeline_mode=pl.Buffered(1))
                if single_buffer_weights else {})

    in_specs = [pl.BlockSpec((tm_eff, Din), lambda i: (i, 0))]   # x row tile
    for li in range(num_layers):
        w1p = weights[4 * li]
        d_in_p = w1p.shape[0]
        in_specs += [
            pl.BlockSpec((d_in_p, Hp), lambda i: (0, 0), **w_kwargs),  # W1
            pl.BlockSpec((1, Hp), lambda i: (0, 0), **w_kwargs),       # b1
            pl.BlockSpec((Hp, Hp), lambda i: (0, 0), **w_kwargs),      # W2'
            pl.BlockSpec((1, Hp), lambda i: (0, 0), **w_kwargs),       # b2'
        ]

    # Explicit VMEM budget: double-buffered activation tiles + resident
    # weights + a few f32 intermediates, with ~50% headroom.
    w_bytes = sum(int(w.size) * w.dtype.itemsize for w in weights)
    w_bytes *= 1 if single_buffer_weights else 2
    act_bytes = (2 * tm_eff * Din * 4 +          # x tile, double buffered
                 2 * tm_eff * H * 4 +            # out tile, double buffered
                 4 * tm_eff * Hp * 4)            # in-flight f32 intermediates
    vmem_limit = int(min(max(int(1.5 * (w_bytes + act_bytes)), 32 << 20),
                         64 << 20))

    kernel = _make_fused_kernel(num_layers)
    return pl.pallas_call(
        kernel,
        out_shape=jax.ShapeDtypeStruct((N, H), jnp.float32),
        grid_spec=pltpu.PrefetchScalarGridSpec(
            num_scalar_prefetch=0,
            grid=grid,
            in_specs=in_specs,
            out_specs=pl.BlockSpec((tm_eff, H), lambda i: (i, 0)),
        ),
        compiler_params=pltpu.CompilerParams(
            dimension_semantics=("parallel",),
            vmem_limit_bytes=vmem_limit),
    )(x, *weights)


def mlp_learner_forward(x, edge_index, prepped, drop_ratio=0.0, *, tm=None):
    """Eval-mode forward of MLP_learner as one fused Pallas kernel call."""
    # edge_index is unused by MLP_learner.forward; dropout is identity (eval).
    del edge_index, drop_ratio
    try:
        return _forward_impl(x, prepped, tm=tm, single_buffer_weights=True)
    except Exception:
        # TODO(synk): pl.Buffered(1) single-buffering rejected by this jax
        # build -- fall back to default (double-buffered) weight blocks.
        return _forward_impl(x, prepped, tm=tm, single_buffer_weights=False)


# --------------------------------------------------------------------------
# Parameter init mimicking PyTorch defaults (Linear uniform, fresh BatchNorm).
# --------------------------------------------------------------------------
def init_params(key, num_gc_layers, isize, hidden_dim):
    params = []
    for i in range(num_gc_layers):
        d_in = isize if i == 0 else hidden_dim
        key, k1, k2, k3, k4 = jax.random.split(key, 5)
        bound1 = 1.0 / jnp.sqrt(d_in)
        bound2 = 1.0 / jnp.sqrt(hidden_dim)
        # stored as (in, out): y = x @ W + b   (== PyTorch x @ W^T + b)
        w1 = jax.random.uniform(k1, (d_in, hidden_dim), jnp.float32,
                                -bound1, bound1)
        b1 = jax.random.uniform(k2, (1, hidden_dim), jnp.float32,
                                -bound1, bound1)
        w2 = jax.random.uniform(k3, (hidden_dim, hidden_dim), jnp.float32,
                                -bound2, bound2)
        b2 = jax.random.uniform(k4, (1, hidden_dim), jnp.float32,
                                -bound2, bound2)
        # BatchNorm1d fresh params (eval): scale = gamma/sqrt(var+eps),
        # shift = beta - mean*scale
        eps = 1e-5
        gamma = jnp.ones((1, hidden_dim), jnp.float32)
        beta = jnp.zeros((1, hidden_dim), jnp.float32)
        running_mean = jnp.zeros((1, hidden_dim), jnp.float32)
        running_var = jnp.ones((1, hidden_dim), jnp.float32)
        scale = gamma / jnp.sqrt(running_var + eps)
        shift = beta - running_mean * scale
        params.append((w1, b1, w2, b2, scale, shift))
    return params


if __name__ == "__main__":
    num_gc_layers = 2
    isize = 16
    hidden_dim = 32
    drop_ratio = 0.5
    N = 100  # not a multiple of the row tile -> exercises the masked edge block

    key = jax.random.PRNGKey(0)
    key, kx, kp = jax.random.split(key, 3)
    x = jax.random.normal(kx, (N, isize), jnp.float32)
    # dummy edge_index (unused by MLP_learner.forward, kept for API parity)
    edge_index = jnp.zeros((2, 4), jnp.int32)

    params = init_params(kp, num_gc_layers, isize, hidden_dim)

    # pure-JAX reference (eval-mode semantics)
    ref = x
    for i in range(num_gc_layers):
        w1, b1, w2, b2, scale, shift = params[i]
        ref = jnp.maximum(ref @ w1 + b1, 0.0) @ w2 + b2
        ref = ref * scale + shift
        if i != num_gc_layers - 1:
            ref = jnp.maximum(ref, 0.0)

    # ---- f32 compute path: tight numerical check --------------------------
    prepped_f32 = prepare_params(params, num_gc_layers,
                                 compute_dtype=jnp.float32)
    out_f32 = mlp_learner_forward(x, edge_index, prepped_f32, drop_ratio)
    out_f32 = jax.block_until_ready(out_f32)
    assert out_f32.shape == (N, hidden_dim)
    assert jnp.allclose(out_f32, ref, atol=1e-5, rtol=1e-5)

    # ---- default bf16 compute path (f32 accumulation): loose check --------
    prepped_bf16 = prepare_params(params, num_gc_layers)   # bf16 default
    out_bf16 = mlp_learner_forward(x, edge_index, prepped_bf16, drop_ratio)
    out_bf16 = jax.block_until_ready(out_bf16)
    assert out_bf16.shape == (N, hidden_dim)
    assert jnp.allclose(out_bf16, ref, atol=5e-2, rtol=5e-2)

    print("KERNEL_OK")
</pallas_src>

<mosaic_0001>
module attributes {stable_mosaic.version = 11 : i64} {
  func.func @kernel(%arg0: i32, %arg1: memref<56x16xf32, #tpu.memory_space<vmem>>, %arg2: memref<16x128xf32, #tpu.memory_space<vmem>>, %arg3: memref<1x128xf32, #tpu.memory_space<vmem>>, %arg4: memref<128x128xf32, #tpu.memory_space<vmem>>, %arg5: memref<1x128xf32, #tpu.memory_space<vmem>>, %arg6: memref<128x128xf32, #tpu.memory_space<vmem>>, %arg7: memref<1x128xf32, #tpu.memory_space<vmem>>, %arg8: memref<128x128xf32, #tpu.memory_space<vmem>>, %arg9: memref<1x128xf32, #tpu.memory_space<vmem>>, %arg10: memref<56x32xf32, #tpu.memory_space<vmem>>) attributes {dimension_semantics = [#tpu.dimension_semantics<parallel>], iteration_bounds = array<i64: 2>, scalar_prefetch = 0 : i64, scratch_operands = 0 : i64, tpu.core_type = #tpu.core_type<tc>, window_params = [{transform_indices = @transform_0, window_bounds = array<i64: 56, 16>}, {pipeline_mode = #tpu.pipeline_mode<synchronous>, transform_indices = @transform_1, window_bounds = array<i64: 16, 128>}, {pipeline_mode = #tpu.pipeline_mode<synchronous>, transform_indices = @transform_2, window_bounds = array<i64: 1, 128>}, {pipeline_mode = #tpu.pipeline_mode<synchronous>, transform_indices = @transform_3, window_bounds = array<i64: 128, 128>}, {pipeline_mode = #tpu.pipeline_mode<synchronous>, transform_indices = @transform_4, window_bounds = array<i64: 1, 128>}, {pipeline_mode = #tpu.pipeline_mode<synchronous>, transform_indices = @transform_5, window_bounds = array<i64: 128, 128>}, {pipeline_mode = #tpu.pipeline_mode<synchronous>, transform_indices = @transform_6, window_bounds = array<i64: 1, 128>}, {pipeline_mode = #tpu.pipeline_mode<synchronous>, transform_indices = @transform_7, window_bounds = array<i64: 128, 128>}, {pipeline_mode = #tpu.pipeline_mode<synchronous>, transform_indices = @transform_8, window_bounds = array<i64: 1, 128>}, {transform_indices = @transform_9, window_bounds = array<i64: 56, 32>}]} {
    %c0 = arith.constant 0 : index
    %c0_0 = arith.constant 0 : index
    %0 = vector.load %arg1[%c0, %c0_0] : memref<56x16xf32, #tpu.memory_space<vmem>>, vector<56x16xf32>
    %c0_1 = arith.constant 0 : index
    %c0_2 = arith.constant 0 : index
    %1 = vector.load %arg2[%c0_1, %c0_2] : memref<16x128xf32, #tpu.memory_space<vmem>>, vector<16x128xf32>
    %cst = arith.constant dense<0.000000e+00> : vector<56x128xf32>
    %2 = tpu.matmul %0, %1, %cst {dimension_numbers = #tpu.dot_dimension_numbers<[1], [0], [0], [1], [0, 0, 1, 1], [], []>} : vector<56x16xf32>, vector<16x128xf32>, vector<56x128xf32> -> vector<56x128xf32>
    %c0_3 = arith.constant 0 : index
    %c0_4 = arith.constant 0 : index
    %3 = vector.load %arg3[%c0_3, %c0_4] : memref<1x128xf32, #tpu.memory_space<vmem>>, vector<1x128xf32>
    %4 = vector.broadcast %3 : vector<1x128xf32> to vector<56x128xf32>
    %5 = arith.addf %2, %4 : vector<56x128xf32>
    %cst_5 = arith.constant 0.000000e+00 : f32
    %6 = vector.broadcast %cst_5 : f32 to vector<56x128xf32>
    %7 = arith.maximumf %5, %6 : vector<56x128xf32>
    %c0_6 = arith.constant 0 : index
    %c0_7 = arith.constant 0 : index
    %8 = vector.load %arg4[%c0_6, %c0_7] : memref<128x128xf32, #tpu.memory_space<vmem>>, vector<128x128xf32>
    %cst_8 = arith.constant dense<0.000000e+00> : vector<56x128xf32>
    %9 = tpu.matmul %7, %8, %cst_8 {dimension_numbers = #tpu.dot_dimension_numbers<[1], [0], [0], [1], [0, 0, 1, 1], [], []>} : vector<56x128xf32>, vector<128x128xf32>, vector<56x128xf32> -> vector<56x128xf32>
    %c0_9 = arith.constant 0 : index
    %c0_10 = arith.constant 0 : index
    %10 = vector.load %arg5[%c0_9, %c0_10] : memref<1x128xf32, #tpu.memory_space<vmem>>, vector<1x128xf32>
    %11 = vector.broadcast %10 : vector<1x128xf32> to vector<56x128xf32>
    %12 = arith.addf %9, %11 : vector<56x128xf32>
    %cst_11 = arith.constant 0.000000e+00 : f32
    %13 = vector.broadcast %cst_11 : f32 to vector<56x128xf32>
    %14 = arith.maximumf %12, %13 : vector<56x128xf32>
    %c0_12 = arith.constant 0 : index
    %c0_13 = arith.constant 0 : index
    %15 = vector.load %arg6[%c0_12, %c0_13] : memref<128x128xf32, #tpu.memory_space<vmem>>, vector<128x128xf32>
    %cst_14 = arith.constant dense<0.000000e+00> : vector<56x128xf32>
    %16 = tpu.matmul %14, %15, %cst_14 {dimension_numbers = #tpu.dot_dimension_numbers<[1], [0], [0], [1], [0, 0, 1, 1], [], []>} : vector<56x128xf32>, vector<128x128xf32>, vector<56x128xf32> -> vector<56x128xf32>
    %c0_15 = arith.constant 0 : index
    %c0_16 = arith.constant 0 : index
    %17 = vector.load %arg7[%c0_15, %c0_16] : memref<1x128xf32, #tpu.memory_space<vmem>>, vector<1x128xf32>
    %18 = vector.broadcast %17 : vector<1x128xf32> to vector<56x128xf32>
    %19 = arith.addf %16, %18 : vector<56x128xf32>
    %cst_17 = arith.constant 0.000000e+00 : f32
    %20 = vector.broadcast %cst_17 : f32 to vector<56x128xf32>
    %21 = arith.maximumf %19, %20 : vector<56x128xf32>
    %c0_18 = arith.constant 0 : index
    %c0_19 = arith.constant 0 : index
    %22 = vector.load %arg8[%c0_18, %c0_19] : memref<128x128xf32, #tpu.memory_space<vmem>>, vector<128x128xf32>
    %cst_20 = arith.constant dense<0.000000e+00> : vector<56x128xf32>
    %23 = tpu.matmul %21, %22, %cst_20 {dimension_numbers = #tpu.dot_dimension_numbers<[1], [0], [0], [1], [0, 0, 1, 1], [], []>} : vector<56x128xf32>, vector<128x128xf32>, vector<56x128xf32> -> vector<56x128xf32>
    %c0_21 = arith.constant 0 : index
    %c0_22 = arith.constant 0 : index
    %24 = vector.load %arg9[%c0_21, %c0_22] : memref<1x128xf32, #tpu.memory_space<vmem>>, vector<1x128xf32>
    %25 = vector.broadcast %24 : vector<1x128xf32> to vector<56x128xf32>
    %26 = arith.addf %23, %25 : vector<56x128xf32>
    %27 = vector.extract_strided_slice %26 {offsets = [0, 0], sizes = [56, 32], strides = [1, 1]} : vector<56x128xf32> to vector<56x32xf32>
    %c0_23 = arith.constant 0 : index
    %c0_24 = arith.constant 0 : index
    %28 = vector.load %arg10[%c0_23, %c0_24] : memref<56x32xf32, #tpu.memory_space<vmem>>, vector<56x32xf32>
    tpu.vector_store %arg10[%c0_23, %c0_24], %27 {strides = array<i32>} : memref<56x32xf32, #tpu.memory_space<vmem>>, vector<56x32xf32>,
    return
  }
  func.func @transform_0(%arg0: i32) -> (i32, i32) {
    %c0_i32 = arith.constant 0 : i32
    %c0_i32_0 = arith.constant 0 : i32
    return %arg0, %c0_i32 : i32, i32
  }
  func.func @transform_1(%arg0: i32) -> (i32, i32) {
    %c0_i32 = arith.constant 0 : i32
    %c0_i32_0 = arith.constant 0 : i32
    %c0_i32_1 = arith.constant 0 : i32
    return %c0_i32, %c0_i32_0 : i32, i32
  }
  func.func @transform_2(%arg0: i32) -> (i32, i32) {
    %c0_i32 = arith.constant 0 : i32
    %c0_i32_0 = arith.constant 0 : i32
    %c0_i32_1 = arith.constant 0 : i32
    return %c0_i32, %c0_i32_0 : i32, i32
  }
  func.func @transform_3(%arg0: i32) -> (i32, i32) {
    %c0_i32 = arith.constant 0 : i32
    %c0_i32_0 = arith.constant 0 : i32
    %c0_i32_1 = arith.constant 0 : i32
    return %c0_i32, %c0_i32_0 : i32, i32
  }
  func.func @transform_4(%arg0: i32) -> (i32, i32) {
    %c0_i32 = arith.constant 0 : i32
    %c0_i32_0 = arith.constant 0 : i32
    %c0_i32_1 = arith.constant 0 : i32
    return %c0_i32, %c0_i32_0 : i32, i32
  }
  func.func @transform_5(%arg0: i32) -> (i32, i32) {
    %c0_i32 = arith.constant 0 : i32
    %c0_i32_0 = arith.constant 0 : i32
    %c0_i32_1 = arith.constant 0 : i32
    return %c0_i32, %c0_i32_0 : i32, i32
  }
  func.func @transform_6(%arg0: i32) -> (i32, i32) {
    %c0_i32 = arith.constant 0 : i32
    %c0_i32_0 = arith.constant 0 : i32
    %c0_i32_1 = arith.constant 0 : i32
    return %c0_i32, %c0_i32_0 : i32, i32
  }
  func.func @transform_7(%arg0: i32) -> (i32, i32) {
    %c0_i32 = arith.constant 0 : i32
    %c0_i32_0 = arith.constant 0 : i32
    %c0_i32_1 = arith.constant 0 : i32
    return %c0_i32, %c0_i32_0 : i32, i32
  }
  func.func @transform_8(%arg0: i32) -> (i32, i32) {
    %c0_i32 = arith.constant 0 : i32
    %c0_i32_0 = arith.constant 0 : i32
    %c0_i32_1 = arith.constant 0 : i32
    return %c0_i32, %c0_i32_0 : i32, i32
  }
  func.func @transform_9(%arg0: i32) -> (i32, i32) {
    %c0_i32 = arith.constant 0 : i32
    %c0_i32_0 = arith.constant 0 : i32
    return %arg0, %c0_i32 : i32, i32
  }
}

module attributes {stable_mosaic.version = 11 : i64} {
  func.func @kernel(%arg0: i32, %arg1: memref<56x16xf32, #tpu.memory_space<vmem>>, %arg2: memref<16x128xf32, #tpu.memory_space<vmem>>, %arg3: memref<1x128xf32, #tpu.memory_space<vmem>>, %arg4: memref<128x128xf32, #tpu.memory_space<vmem>>, %arg5: memref<1x128xf32, #tpu.memory_space<vmem>>, %arg6: memref<128x128xf32, #tpu.memory_space<vmem>>, %arg7: memref<1x128xf32, #tpu.memory_space<vmem>>, %arg8: memref<128x128xf32, #tpu.memory_space<vmem>>, %arg9: memref<1x128xf32, #tpu.memory_space<vmem>>, %arg10: memref<56x32xf32, #tpu.memory_space<vmem>>) attributes {dimension_semantics = [#tpu.dimension_semantics<parallel>], iteration_bounds = array<i64: 2>, scalar_prefetch = 0 : i64, scratch_operands = 0 : i64, tpu.core_type = #tpu.core_type<tc>, window_params = [{transform_indices = @transform_0, window_bounds = array<i64: 56, 16>}, {pipeline_mode = #tpu.pipeline_mode<synchronous>, transform_indices = @transform_1, window_bounds = array<i64: 16, 128>}, {pipeline_mode = #tpu.pipeline_mode<synchronous>, transform_indices = @transform_2, window_bounds = array<i64: 1, 128>}, {pipeline_mode = #tpu.pipeline_mode<synchronous>, transform_indices = @transform_3, window_bounds = array<i64: 128, 128>}, {pipeline_mode = #tpu.pipeline_mode<synchronous>, transform_indices = @transform_4, window_bounds = array<i64: 1, 128>}, {pipeline_mode = #tpu.pipeline_mode<synchronous>, transform_indices = @transform_5, window_bounds = array<i64: 128, 128>}, {pipeline_mode = #tpu.pipeline_mode<synchronous>, transform_indices = @transform_6, window_bounds = array<i64: 1, 128>}, {pipeline_mode = #tpu.pipeline_mode<synchronous>, transform_indices = @transform_7, window_bounds = array<i64: 128, 128>}, {pipeline_mode = #tpu.pipeline_mode<synchronous>, transform_indices = @transform_8, window_bounds = array<i64: 1, 128>}, {transform_indices = @transform_9, window_bounds = array<i64: 56, 32>}]} {
    %c0 = arith.constant 0 : index
    %c0_0 = arith.constant 0 : index
    %0 = vector.load %arg1[%c0, %c0_0] : memref<56x16xf32, #tpu.memory_space<vmem>>, vector<56x16xf32>
    %c0_1 = arith.constant 0 : index
    %c0_2 = arith.constant 0 : index
    %1 = vector.load %arg2[%c0_1, %c0_2] : memref<16x128xf32, #tpu.memory_space<vmem>>, vector<16x128xf32>
    %cst = arith.constant dense<0.000000e+00> : vector<56x128xf32>
    %2 = tpu.matmul %0, %1, %cst {dimension_numbers = #tpu.dot_dimension_numbers<[1], [0], [0], [1], [0, 0, 1, 1], [], []>} : vector<56x16xf32>, vector<16x128xf32>, vector<56x128xf32> -> vector<56x128xf32>
    %c0_3 = arith.constant 0 : index
    %c0_4 = arith.constant 0 : index
    %3 = vector.load %arg3[%c0_3, %c0_4] : memref<1x128xf32, #tpu.memory_space<vmem>>, vector<1x128xf32>
    %4 = vector.broadcast %3 : vector<1x128xf32> to vector<56x128xf32>
    %5 = arith.addf %2, %4 : vector<56x128xf32>
    %cst_5 = arith.constant 0.000000e+00 : f32
    %6 = vector.broadcast %cst_5 : f32 to vector<56x128xf32>
    %7 = arith.maximumf %5, %6 : vector<56x128xf32>
    %c0_6 = arith.constant 0 : index
    %c0_7 = arith.constant 0 : index
    %8 = vector.load %arg4[%c0_6, %c0_7] : memref<128x128xf32, #tpu.memory_space<vmem>>, vector<128x128xf32>
    %cst_8 = arith.constant dense<0.000000e+00> : vector<56x128xf32>
    %9 = tpu.matmul %7, %8, %cst_8 {dimension_numbers = #tpu.dot_dimension_numbers<[1], [0], [0], [1], [0, 0, 1, 1], [], []>} : vector<56x128xf32>, vector<128x128xf32>, vector<56x128xf32> -> vector<56x128xf32>
    %c0_9 = arith.constant 0 : index
    %c0_10 = arith.constant 0 : index
    %10 = vector.load %arg5[%c0_9, %c0_10] : memref<1x128xf32, #tpu.memory_space<vmem>>, vector<1x128xf32>
    %11 = vector.broadcast %10 : vector<1x128xf32> to vector<56x128xf32>
    %12 = arith.addf %9, %11 : vector<56x128xf32>
    %cst_11 = arith.constant 0.000000e+00 : f32
    %13 = vector.broadcast %cst_11 : f32 to vector<56x128xf32>
    %14 = arith.maximumf %12, %13 : vector<56x128xf32>
    %c0_12 = arith.constant 0 : index
    %c0_13 = arith.constant 0 : index
    %15 = vector.load %arg6[%c0_12, %c0_13] : memref<128x128xf32, #tpu.memory_space<vmem>>, vector<128x128xf32>
    %cst_14 = arith.constant dense<0.000000e+00> : vector<56x128xf32>
    %16 = tpu.matmul %14, %15, %cst_14 {dimension_numbers = #tpu.dot_dimension_numbers<[1], [0], [0], [1], [0, 0, 1, 1], [], []>} : vector<56x128xf32>, vector<128x128xf32>, vector<56x128xf32> -> vector<56x128xf32>
    %c0_15 = arith.constant 0 : index
    %c0_16 = arith.constant 0 : index
    %17 = vector.load %arg7[%c0_15, %c0_16] : memref<1x128xf32, #tpu.memory_space<vmem>>, vector<1x128xf32>
    %18 = vector.broadcast %17 : vector<1x128xf32> to vector<56x128xf32>
    %19 = arith.addf %16, %18 : vector<56x128xf32>
    %cst_17 = arith.constant 0.000000e+00 : f32
    %20 = vector.broadcast %cst_17 : f32 to vector<56x128xf32>
    %21 = arith.maximumf %19, %20 : vector<56x128xf32>
    %c0_18 = arith.constant 0 : index
    %c0_19 = arith.constant 0 : index
    %22 = vector.load %arg8[%c0_18, %c0_19] : memref<128x128xf32, #tpu.memory_space<vmem>>, vector<128x128xf32>
    %cst_20 = arith.constant dense<0.000000e+00> : vector<56x128xf32>
    %23 = tpu.matmul %21, %22, %cst_20 {dimension_numbers = #tpu.dot_dimension_numbers<[1], [0], [0], [1], [0, 0, 1, 1], [], []>} : vector<56x128xf32>, vector<128x128xf32>, vector<56x128xf32> -> vector<56x128xf32>
    %c0_21 = arith.constant 0 : index
    %c0_22 = arith.constant 0 : index
    %24 = vector.load %arg9[%c0_21, %c0_22] : memref<1x128xf32, #tpu.memory_space<vmem>>, vector<1x128xf32>
    %25 = vector.broadcast %24 : vector<1x128xf32> to vector<56x128xf32>
    %26 = arith.addf %23, %25 : vector<56x128xf32>
    %27 = vector.extract_strided_slice %26 {offsets = [0, 0], sizes = [56, 32], strides = [1, 1]} : vector<56x128xf32> to vector<56x32xf32>
    %c0_23 = arith.constant 0 : index
    %c0_24 = arith.constant 0 : index
    %28 = vector.load %arg10[%c0_23, %c0_24] : memref<56x32xf32, #tpu.memory_space<vmem>>, vector<56x32xf32>
    tpu.vector_store %arg10[%c0_23, %c0_24], %27 {strides = array<i32>} : memref<56x32xf32, #tpu.memory_space<vmem>>, vector<56x32xf32>,
    return
  }
  func.func @transform_0(%arg0: i32) -> (i32, i32) {
    %c0_i32 = arith.constant 0 : i32
    %c0_i32_0 = arith.constant 0 : i32
    return %arg0, %c0_i32 : i32, i32
  }
  func.func @transform_1(%arg0: i32) -> (i32, i32) {
    %c0_i32 = arith.constant 0 : i32
    %c0_i32_0 = arith.constant 0 : i32
    %c0_i32_1 = arith.constant 0 : i32
    return %c0_i32, %c0_i32_0 : i32, i32
  }
  func.func @transform_2(%arg0: i32) -> (i32, i32) {
    %c0_i32 = arith.constant 0 : i32
    %c0_i32_0 = arith.constant 0 : i32
    %c0_i32_1 = arith.constant 0 : i32
    return %c0_i32, %c0_i32_0 : i32, i32
  }
  func.func @transform_3(%arg0: i32) -> (i32, i32) {
    %c0_i32 = arith.constant 0 : i32
    %c0_i32_0 = arith.constant 0 : i32
    %c0_i32_1 = arith.constant 0 : i32
    return %c0_i32, %c0_i32_0 : i32, i32
  }
  func.func @transform_4(%arg0: i32) -> (i32, i32) {
    %c0_i32 = arith.constant 0 : i32
    %c0_i32_0 = arith.constant 0 : i32
    %c0_i32_1 = arith.constant 0 : i32
    return %c0_i32, %c0_i32_0 : i32, i32
  }
  func.func @transform_5(%arg0: i32) -> (i32, i32) {
    %c0_i32 = arith.constant 0 : i32
    %c0_i32_0 = arith.constant 0 : i32
    %c0_i32_1 = arith.constant 0 : i32
    return %c0_i32, %c0_i32_0 : i32, i32
  }
  func.func @transform_6(%arg0: i32) -> (i32, i32) {
    %c0_i32 = arith.constant 0 : i32
    %c0_i32_0 = arith.constant 0 : i32
    %c0_i32_1 = arith.constant 0 : i32
    return %c0_i32, %c0_i32_0 : i32, i32
  }
  func.func @transform_7(%arg0: i32) -> (i32, i32) {
    %c0_i32 = arith.constant 0 : i32
    %c0_i32_0 = arith.constant 0 : i32
    %c0_i32_1 = arith.constant 0 : i32
    return %c0_i32, %c0_i32_0 : i32, i32
  }
  func.func @transform_8(%arg0: i32) -> (i32, i32) {
    %c0_i32 = arith.constant 0 : i32
    %c0_i32_0 = arith.constant 0 : i32
    %c0_i32_1 = arith.constant 0 : i32
    return %c0_i32, %c0_i32_0 : i32, i32
  }
  func.func @transform_9(%arg0: i32) -> (i32, i32) {
    %c0_i32 = arith.constant 0 : i32
    %c0_i32_0 = arith.constant 0 : i32
    return %arg0, %c0_i32 : i32, i32
  }
}

</mosaic_0001>

<llo_original>
// kernel: tpu_custom_call.1
$region0: #{tpu_custom_call.1}
  #allocation0 [shape = 'u32[]', space=smem, size = 0x4, offset = 0x4, fixed_abs, tag = 'smem constant byte address 0x4 - core index']
  #allocation1 [shape = 'u32[144,128]{1,0:T(1,128)}', space=vmem, size = 0x12000, scoped, tag = 'internal scratch']
  %s0 = inlined_call_operand.vmem [shape: f32[100,16], index: 0, kind: input, shape index: {}]
  %s1 = inlined_call_operand.hbm [shape: f32[16,128], index: 1, kind: input, shape index: {}]
  %s2 = inlined_call_operand.vmem [shape: f32[1,128], index: 2, kind: input, shape index: {}]
  %s3 = inlined_call_operand.hbm [shape: f32[128,128], index: 3, kind: input, shape index: {}]
  %s4 = inlined_call_operand.hbm [shape: f32[1,128], index: 4, kind: input, shape index: {}]
  %s5 = inlined_call_operand.vmem [shape: f32[128,128], index: 5, kind: input, shape index: {}]
  %s6 = inlined_call_operand.vmem [shape: f32[1,128], index: 6, kind: input, shape index: {}]
  %s7 = inlined_call_operand.hbm [shape: f32[128,128], index: 7, kind: input, shape index: {}]
  %s8 = inlined_call_operand.vmem [shape: f32[1,128], index: 8, kind: input, shape index: {}]
  %s9 = inlined_call_operand.vmem [shape: f32[100,32], index: 9, kind: output, shape index: {}]
  %s10 = sld [smem:[#allocation0]]
  $region133: #{tpu_custom_call.1} parent=0
    _
  %s12 = ssub.s32 1, %s10
  %s13 = scalar_select 0, %s12, %s10
  $region1: #{tpu_custom_call.1} parent=0
    #allocation2 [shape = 'u8[8192]{0}', space=vmem, size = 0x2000, scoped, tag = 'input window, operand 1, single buffered']
    #allocation3 [shape = 's32[2]{0}', space=sflag, size = 0x8, scoped, tag = 'scoped memory for tpu_custom_call.1']
    #allocation4 [shape = 'u8[65536]{0}', space=vmem, size = 0x10000, scoped, tag = 'input window, operand 3, single buffered']
    #allocation5 [shape = 's32[1]{0}', space=sflag, size = 0x4, scoped, tag = 'scoped memory for tpu_custom_call.1']
    #allocation6 [shape = 'u8[512]{0}', space=vmem, size = 0x400, scoped, tag = 'input window, operand 4, single buffered']
    #allocation7 [shape = 'u8[65536]{0}', space=vmem, size = 0x10000, scoped, tag = 'input window, operand 7, single buffered']
    #allocation8 [shape = 's32[1]{0}', space=sflag, size = 0x4, scoped, tag = 'scoped memory for tpu_custom_call.1']
    #allocation9 [shape = 'u8[57344]{0}', space=vmem, size = 0xe000, scoped, tag = 'output window, operand 0']
    %14 = vsyncpa [#allocation3], 0
    %15 = vsyncpa [#allocation5], 0
    %16 = vsyncpa [#allocation8], 0
    loop: start=0, step=1, limit=4
    $region2: #{tpu_custom_call.1} parent=1 // loop_pre_header
      _
    $region3: #{tpu_custom_call.1} parent=1 // loop_header
      %s18 = sphi 0, %s22
      %p19 = scmp.ge.s32.totalorder %s18, 4
      %s28 = sphi 0, %s30
      %s31 = sphi 0, %s28
      %s32 = sphi 0, %s31
      %s48 = sphi 0, %s32
      %s52 = sphi 0, %s52
      %s54 = sphi 0, %s52
      %s55 = sphi 0, %s54
      %s69 = sphi 0, %s55
      %s73 = sphi 0, %s73
      %s75 = sphi 0, %s73
      %s76 = sphi 0, %s75
      %s90 = sphi 0, %s76
      %s94 = sphi 0, %s94
      %s96 = sphi 0, %s94
      %s97 = sphi 0, %s96
      %s111 = sphi 0, %s97
      %s115 = sphi 0, %s115
      %s117 = sphi 0, %s115
      %s118 = sphi 0, %s117
      %s132 = sphi 0, %s118
      %s136 = sphi 0, %s136
      %s138 = sphi 0, %s136
      %s139 = sphi 0, %s138
      %s153 = sphi 0, %s139
      %s157 = sphi 0, %s157
      %s159 = sphi 0, %s157
      %s160 = sphi 0, %s159
      %s174 = sphi 0, %s160
      %s178 = sphi 0, %s178
      %s180 = sphi 0, %s178
      %s181 = sphi 0, %s180
      %s195 = sphi 0, %s181
      %s199 = sphi 0, %s199
      %s201 = sphi 0, %s199
      %s202 = sphi 0, %s201
      %s216 = sphi 0, %s202
      %s222 = sphi 0, %s224
      %s225 = sphi 0, %s222
      %s226 = sphi 0, %s225
      %s242 = sphi 0, %s226
    $region4: #{tpu_custom_call.1} parent=1 // loop_header_branch
      %21 = sbr.rel (%p19) target = $region8
    $region5: #{tpu_custom_call.1} parent=1 // loop_body
      %s23 = ssub.s32 %s18, 1
      %s24 = ssub.s32 %s18, 2
      %s25 = sadd.s32 %s18, 1
      %s26 = ssub.s32 %s18, %s25
      %p27 = scmp.eq.s32.totalorder %s26, 0
      %s29 = sadd.s32 %s28, 1
      %s30 = scalar_select %p27, %s28, %s29
      %p33 = pneg %p27
      %p34 = scmp.eq.s32.totalorder %s18, 1
      %p35 = por %p33, %p34
      %p36 = scmp.ne.s32.totalorder %s28, %s31
      %p37 = scmp.eq.s32.totalorder %s18, 0
      %p38 = por %p36, %p37
      %p39 = scmp.ne.s32.totalorder %s28, %s31
      %p40 = scmp.eq.s32.totalorder %s23, 1
      %p41 = por %p39, %p40
      %p42 = scmp.ne.s32.totalorder %s31, %s32
      %p43 = scmp.eq.s32.totalorder %s23, 0
      %p44 = por %p42, %p43
      %p45 = scmp.ne.s32.totalorder %s31, %s32
      %p46 = scmp.eq.s32.totalorder %s24, 1
      %p47 = por %p45, %p46
      %p49 = scmp.ne.s32.totalorder %s32, %s48
      %p50 = scmp.eq.s32.totalorder %s24, 0
      %p51 = por %p49, %p50
      %s53 = sadd.s32 %s52, 1
      %p56 = scmp.eq.s32.totalorder %s18, 1
      %p57 = scmp.ne.s32.totalorder %s52, %s54
      %p58 = scmp.eq.s32.totalorder %s18, 0
      %p59 = por %p57, %p58
      %p60 = scmp.ne.s32.totalorder %s52, %s54
      %p61 = scmp.eq.s32.totalorder %s23, 1
      %p62 = por %p60, %p61
      %p63 = scmp.ne.s32.totalorder %s54, %s55
      %p64 = scmp.eq.s32.totalorder %s23, 0
      %p65 = por %p63, %p64
      %p66 = scmp.ne.s32.totalorder %s54, %s55
      %p67 = scmp.eq.s32.totalorder %s24, 1
      %p68 = por %p66, %p67
      %p70 = scmp.ne.s32.totalorder %s55, %s69
      %p71 = scmp.eq.s32.totalorder %s24, 0
      %p72 = por %p70, %p71
      %s74 = sadd.s32 %s73, 1
      %p77 = scmp.eq.s32.totalorder %s18, 1
      %p78 = scmp.ne.s32.totalorder %s73, %s75
      %p79 = scmp.eq.s32.totalorder %s18, 0
      %p80 = por %p78, %p79
      %p81 = scmp.ne.s32.totalorder %s73, %s75
      %p82 = scmp.eq.s32.totalorder %s23, 1
      %p83 = por %p81, %p82
      %p84 = scmp.ne.s32.totalorder %s75, %s76
      %p85 = scmp.eq.s32.totalorder %s23, 0
      %p86 = por %p84, %p85
      %p87 = scmp.ne.s32.totalorder %s75, %s76
      %p88 = scmp.eq.s32.totalorder %s24, 1
      %p89 = por %p87, %p88
      %p91 = scmp.ne.s32.totalorder %s76, %s90
      %p92 = scmp.eq.s32.totalorder %s24, 0
      %p93 = por %p91, %p92
      %s95 = sadd.s32 %s94, 1
      %p98 = scmp.eq.s32.totalorder %s18, 1
      %p99 = scmp.ne.s32.totalorder %s94, %s96
      %p100 = scmp.eq.s32.totalorder %s18, 0
      %p101 = por %p99, %p100
      %p102 = scmp.ne.s32.totalorder %s94, %s96
      %p103 = scmp.eq.s32.totalorder %s23, 1
      %p104 = por %p102, %p103
      %p105 = scmp.ne.s32.totalorder %s96, %s97
      %p106 = scmp.eq.s32.totalorder %s23, 0
      %p107 = por %p105, %p106
      %p108 = scmp.ne.s32.totalorder %s96, %s97
      %p109 = scmp.eq.s32.totalorder %s24, 1
      %p110 = por %p108, %p109
      %p112 = scmp.ne.s32.totalorder %s97, %s111
      %p113 = scmp.eq.s32.totalorder %s24, 0
      %p114 = por %p112, %p113
      %s116 = sadd.s32 %s115, 1
      %p119 = scmp.eq.s32.totalorder %s18, 1
      %p120 = scmp.ne.s32.totalorder %s115, %s117
      %p121 = scmp.eq.s32.totalorder %s18, 0
      %p122 = por %p120, %p121
      %p123 = scmp.ne.s32.totalorder %s115, %s117
      %p124 = scmp.eq.s32.totalorder %s23, 1
      %p125 = por %p123, %p124
      %p126 = scmp.ne.s32.totalorder %s117, %s118
      %p127 = scmp.eq.s32.totalorder %s23, 0
      %p128 = por %p126, %p127
      %p129 = scmp.ne.s32.totalorder %s117, %s118
      %p130 = scmp.eq.s32.totalorder %s24, 1
      %p131 = por %p129, %p130
      %p133 = scmp.ne.s32.totalorder %s118, %s132
      %p134 = scmp.eq.s32.totalorder %s24, 0
      %p135 = por %p133, %p134
      %s137 = sadd.s32 %s136, 1
      %p140 = scmp.eq.s32.totalorder %s18, 1
      %p141 = scmp.ne.s32.totalorder %s136, %s138
      %p142 = scmp.eq.s32.totalorder %s18, 0
      %p143 = por %p141, %p142
      %p144 = scmp.ne.s32.totalorder %s136, %s138
      %p145 = scmp.eq.s32.totalorder %s23, 1
      %p146 = por %p144, %p145
      %p147 = scmp.ne.s32.totalorder %s138, %s139
      %p148 = scmp.eq.s32.totalorder %s23, 0
      %p149 = por %p147, %p148
      %p150 = scmp.ne.s32.totalorder %s138, %s139
      %p151 = scmp.eq.s32.totalorder %s24, 1
      %p152 = por %p150, %p151
      %p154 = scmp.ne.s32.totalorder %s139, %s153
      %p155 = scmp.eq.s32.totalorder %s24, 0
      %p156 = por %p154, %p155
      %s158 = sadd.s32 %s157, 1
      %p161 = scmp.eq.s32.totalorder %s18, 1
      %p162 = scmp.ne.s32.totalorder %s157, %s159
      %p163 = scmp.eq.s32.totalorder %s18, 0
      %p164 = por %p162, %p163
      %p165 = scmp.ne.s32.totalorder %s157, %s159
      %p166 = scmp.eq.s32.totalorder %s23, 1
      %p167 = por %p165, %p166
      %p168 = scmp.ne.s32.totalorder %s159, %s160
      %p169 = scmp.eq.s32.totalorder %s23, 0
      %p170 = por %p168, %p169
      %p171 = scmp.ne.s32.totalorder %s159, %s160
      %p172 = scmp.eq.s32.totalorder %s24, 1
      %p173 = por %p171, %p172
      %p175 = scmp.ne.s32.totalorder %s160, %s174
      %p176 = scmp.eq.s32.totalorder %s24, 0
      %p177 = por %p175, %p176
      %s179 = sadd.s32 %s178, 1
      %p182 = scmp.eq.s32.totalorder %s18, 1
      %p183 = scmp.ne.s32.totalorder %s178, %s180
      %p184 = scmp.eq.s32.totalorder %s18, 0
      %p185 = por %p183, %p184
      %p186 = scmp.ne.s32.totalorder %s178, %s180
      %p187 = scmp.eq.s32.totalorder %s23, 1
      %p188 = por %p186, %p187
      %p189 = scmp.ne.s32.totalorder %s180, %s181
      %p190 = scmp.eq.s32.totalorder %s23, 0
      %p191 = por %p189, %p190
      %p192 = scmp.ne.s32.totalorder %s180, %s181
      %p193 = scmp.eq.s32.totalorder %s24, 1
      %p194 = por %p192, %p193
      %p196 = scmp.ne.s32.totalorder %s181, %s195
      %p197 = scmp.eq.s32.totalorder %s24, 0
      %p198 = por %p196, %p197
      %s200 = sadd.s32 %s199, 1
      %p203 = scmp.eq.s32.totalorder %s18, 1
      %p204 = scmp.ne.s32.totalorder %s199, %s201
      %p205 = scmp.eq.s32.totalorder %s18, 0
      %p206 = por %p204, %p205
      %p207 = scmp.ne.s32.totalorder %s199, %s201
      %p208 = scmp.eq.s32.totalorder %s23, 1
      %p209 = por %p207, %p208
      %p210 = scmp.ne.s32.totalorder %s201, %s202
      %p211 = scmp.eq.s32.totalorder %s23, 0
      %p212 = por %p210, %p211
      %p213 = scmp.ne.s32.totalorder %s201, %s202
      %p214 = scmp.eq.s32.totalorder %s24, 1
      %p215 = por %p213, %p214
      %p217 = scmp.ne.s32.totalorder %s202, %s216
      %p218 = scmp.eq.s32.totalorder %s24, 0
      %p219 = por %p217, %p218
      %s220 = ssub.s32 %s18, %s25
      %p221 = scmp.eq.s32.totalorder %s220, 0
      %s223 = sadd.s32 %s222, 1
      %s224 = scalar_select %p221, %s222, %s223
      %p227 = pneg %p221
      %p228 = scmp.eq.s32.totalorder %s18, 1
      %p229 = por %p227, %p228
      %p230 = scmp.ne.s32.totalorder %s222, %s225
      %p231 = scmp.eq.s32.totalorder %s18, 0
      %p232 = por %p230, %p231
      %p233 = scmp.ne.s32.totalorder %s222, %s225
      %p234 = scmp.eq.s32.totalorder %s23, 1
      %p235 = por %p233, %p234
      %p236 = scmp.ne.s32.totalorder %s225, %s226
      %p237 = scmp.eq.s32.totalorder %s23, 0
      %p238 = por %p236, %p237
      %p239 = scmp.ne.s32.totalorder %s225, %s226
      %p240 = scmp.eq.s32.totalorder %s24, 1
      %p241 = por %p239, %p240
      %p243 = scmp.ne.s32.totalorder %s226, %s242
      %p244 = scmp.eq.s32.totalorder %s24, 0
      %p245 = por %p243, %p244
      %p246 = scmp.le.s32.totalorder 1, %s18
      %p247 = scmp.lt.s32.totalorder %s18, 3
      %p248 = pnand %p246, %p247
      %p249 = pneg %p248
      // Predicated region
      $region9: #{tpu_custom_call.1} parent=5 // pred_check
        _
      $region10: #{tpu_custom_call.1} parent=5 // pred_check_branch
        %251 = sbr.rel (%p248) target = $region12
      $region11: #{tpu_custom_call.1} parent=5 // pred_region
        %s252 = ssub.s32 %s18, 1
        // Predicated region
        $region13: #{tpu_custom_call.1} parent=11 // pred_check
          %p253 = pneg %p65
        $region14: #{tpu_custom_call.1} parent=11 // pred_check_branch
          %255 = sbr.rel (%p253) target = $region16
        $region15: #{tpu_custom_call.1} parent=11 // pred_region
          %s257 = ssub.s32 256, 256
          %258 = vsyncadd [#allocation3], %s257
          %s259 = sshll.u32 [#allocation2], 4
          %s260 = int_to_ptr.vmem [resolvable:$true] %s259
          %265 = dma.hbm_to_vmem [thread:$0]  %s1, 256, %s260, [#allocation3], 128, 128, 8
        $region16: #{tpu_custom_call.1} parent=11 // pred_fallthru
          _
        // Predicated region
        $region17: #{tpu_custom_call.1} parent=11 // pred_check
          %p266 = pneg %p86
        $region18: #{tpu_custom_call.1} parent=11 // pred_check_branch
          %268 = sbr.rel (%p266) target = $region20
        $region19: #{tpu_custom_call.1} parent=11 // pred_region
          _
        $region20: #{tpu_custom_call.1} parent=11 // pred_fallthru
          _
        // Predicated region
        $region21: #{tpu_custom_call.1} parent=11 // pred_check
          %p269 = pneg %p107
        $region22: #{tpu_custom_call.1} parent=11 // pred_check_branch
          %271 = sbr.rel (%p269) target = $region24
        $region23: #{tpu_custom_call.1} parent=11 // pred_region
          %s273 = ssub.s32 2048, 2048
          %274 = vsyncadd [#allocation5], %s273
          %s275 = sshll.u32 [#allocation4], 4
          %s276 = int_to_ptr.vmem [resolvable:$true] %s275
          %281 = dma.hbm_to_vmem [thread:$0]  %s3, 2048, %s276, [#allocation5], 128, 128, 8
        $region24: #{tpu_custom_call.1} parent=11 // pred_fallthru
          _
        // Predicated region
        $region25: #{tpu_custom_call.1} parent=11 // pred_check
          %p282 = pneg %p128
        $region26: #{tpu_custom_call.1} parent=11 // pred_check_branch
          %284 = sbr.rel (%p282) target = $region28
        $region27: #{tpu_custom_call.1} parent=11 // pred_region
          %s286 = ssub.s32 16, 16
          %287 = vsyncadd [#allocation5], %s286
          %s289 = sshll.u32 [#allocation6], 4
          %s290 = int_to_ptr.vmem [resolvable:$true] %s289
          %292 = dma.hbm_to_vmem [thread:$0]  %s4, 16, %s290, [#allocation5]
        $region28: #{tpu_custom_call.1} parent=11 // pred_fallthru
          _
        // Predicated region
        $region29: #{tpu_custom_call.1} parent=11 // pred_check
          %p293 = pneg %p149
        $region30: #{tpu_custom_call.1} parent=11 // pred_check_branch
          %295 = sbr.rel (%p293) target = $region32
        $region31: #{tpu_custom_call.1} parent=11 // pred_region
          _
        $region32: #{tpu_custom_call.1} parent=11 // pred_fallthru
          _
        // Predicated region
        $region33: #{tpu_custom_call.1} parent=11 // pred_check
          %p296 = pneg %p170
        $region34: #{tpu_custom_call.1} parent=11 // pred_check_branch
          %298 = sbr.rel (%p296) target = $region36
        $region35: #{tpu_custom_call.1} parent=11 // pred_region
          _
        $region36: #{tpu_custom_call.1} parent=11 // pred_fallthru
          _
        // Predicated region
        $region37: #{tpu_custom_call.1} parent=11 // pred_check
          %p299 = pneg %p191
        $region38: #{tpu_custom_call.1} parent=11 // pred_check_branch
          %301 = sbr.rel (%p299) target = $region40
        $region39: #{tpu_custom_call.1} parent=11 // pred_region
          %s303 = ssub.s32 2048, 2048
          %304 = vsyncadd [#allocation8], %s303
          %s305 = sshll.u32 [#allocation7], 4
          %s306 = int_to_ptr.vmem [resolvable:$true] %s305
          %311 = dma.hbm_to_vmem [thread:$0]  %s7, 2048, %s306, [#allocation8], 128, 128, 8
        $region40: #{tpu_custom_call.1} parent=11 // pred_fallthru
          _
        // Predicated region
        $region41: #{tpu_custom_call.1} parent=11 // pred_check
          %p312 = pneg %p212
        $region42: #{tpu_custom_call.1} parent=11 // pred_check_branch
          %314 = sbr.rel (%p312) target = $region44
        $region43: #{tpu_custom_call.1} parent=11 // pred_region
          _
        $region44: #{tpu_custom_call.1} parent=11 // pred_fallthru
          _
      $region12: #{tpu_custom_call.1} parent=5 // pred_fallthru
        _
      %p315 = scmp.lt.s32.totalorder %s18, 2
      // Predicated region
      $region45: #{tpu_custom_call.1} parent=5 // pred_check
        %p316 = pneg %p315
      $region46: #{tpu_custom_call.1} parent=5 // pred_check_branch
        %318 = sbr.rel (%p316) target = $region48
      $region47: #{tpu_custom_call.1} parent=5 // pred_region
        // Predicated region
        $region49: #{tpu_custom_call.1} parent=47 // pred_check
          %p319 = pneg %p38
        $region50: #{tpu_custom_call.1} parent=47 // pred_check_branch
          %321 = sbr.rel (%p319) target = $region52
        $region51: #{tpu_custom_call.1} parent=47 // pred_region
          %s322 = smul.u32 7, %s18
          %s323 = ssub.s32 13, %s322
          %p324 = scmp.lt.s32.totalorder %s323, 7
          %s325 = scalar_select %p324, %s323, 7
          %s326 = smul.u32 128, %s325
          %p327 = scmp.lt.s32.totalorder %s322, 12
          %s328 = scalar_select %p327, %s322, 12
          %s329 = smul.addr %s328, 8
          %s330 = scalar_lea.vmem %s0, %s329
          %s331 = smul.u32 7, %s18
          %s332 = ssub.s32 13, %s331
          %p333 = scmp.lt.s32.totalorder %s332, 7
          %s334 = scalar_select %p333, %s332, 7
          %s335 = smul.u32 128, %s334
        $region52: #{tpu_custom_call.1} parent=47 // pred_fallthru
          _
      $region48: #{tpu_custom_call.1} parent=5 // pred_fallthru
        _
      %p336 = scmp.le.s32.totalorder 1, %s18
      %p337 = scmp.lt.s32.totalorder %s18, 3
      %p338 = pnand %p336, %p337
      %p339 = pneg %p338
      // Predicated region
      $region53: #{tpu_custom_call.1} parent=5 // pred_check
        _
      $region54: #{tpu_custom_call.1} parent=5 // pred_check_branch
        %341 = sbr.rel (%p338) target = $region56
      $region55: #{tpu_custom_call.1} parent=5 // pred_region
        %s342 = ssub.s32 %s18, 1
        // Predicated region
        $region57: #{tpu_custom_call.1} parent=55 // pred_check
          %p343 = pneg %p65
        $region58: #{tpu_custom_call.1} parent=55 // pred_check_branch
          %345 = sbr.rel (%p343) target = $region60
        $region59: #{tpu_custom_call.1} parent=55 // pred_region
          %346 = dma.done [#allocation3], 256
        $region60: #{tpu_custom_call.1} parent=55 // pred_fallthru
          _
        // Predicated region
        $region61: #{tpu_custom_call.1} parent=55 // pred_check
          %p347 = pneg %p107
        $region62: #{tpu_custom_call.1} parent=55 // pred_check_branch
          %349 = sbr.rel (%p347) target = $region64
        $region63: #{tpu_custom_call.1} parent=55 // pred_region
          %350 = dma.done [#allocation5], 2048
        $region64: #{tpu_custom_call.1} parent=55 // pred_fallthru
          _
        // Predicated region
        $region65: #{tpu_custom_call.1} parent=55 // pred_check
          %p351 = pneg %p128
        $region66: #{tpu_custom_call.1} parent=55 // pred_check_branch
          %353 = sbr.rel (%p351) target = $region68
        $region67: #{tpu_custom_call.1} parent=55 // pred_region
          %354 = dma.done [#allocation5], 16
        $region68: #{tpu_custom_call.1} parent=55 // pred_fallthru
          _
        // Predicated region
        $region69: #{tpu_custom_call.1} parent=55 // pred_check
          %p355 = pneg %p191
        $region70: #{tpu_custom_call.1} parent=55 // pred_check_branch
          %357 = sbr.rel (%p355) target = $region72
        $region71: #{tpu_custom_call.1} parent=55 // pred_region
          %358 = dma.done [#allocation8], 2048
        $region72: #{tpu_custom_call.1} parent=55 // pred_fallthru
          _
        %s359 = smul.u32 7, %s23
        %s360 = ssub.s32 13, %s359
        %p361 = scmp.lt.s32.totalorder %s360, 7
        %s362 = scalar_select %p361, %s360, 7
        %s363 = smul.u32 128, %s362
        %p364 = scmp.lt.s32.totalorder %s359, 12
        %s365 = scalar_select %p364, %s359, 12
        %s366 = smul.addr %s365, 8
        %s367 = scalar_lea.vmem %s0, %s366
        %p368 = pneg %p44
        %p369 = pneg %p41
        %p370 = pneg %p65
        %p371 = pneg %p62
        %p372 = pneg %p86
        %p373 = pneg %p83
        %p374 = pneg %p107
        %p375 = pneg %p104
        %p376 = pneg %p128
        %p377 = pneg %p125
        %p378 = pneg %p149
        %p379 = pneg %p146
        %p380 = pneg %p170
        %p381 = pneg %p167
        %p382 = pneg %p191
        %p383 = pneg %p188
        %p384 = pneg %p212
        %p385 = pneg %p209
        %p386 = pneg %p238
        %p387 = pneg %p235
        %s388 = sand.u32 %s225, 1
        %s389 = sand.u32 %s225, 1
        %s390 = smul.addr %s389, 56
        %s391 = scalar_lea.vmem [#allocation9], %s390
        %s392 = smul.u32 7, %s23
        %s393 = ssub.s32 13, %s392
        %p394 = scmp.lt.s32.totalorder %s393, 7
        %s395 = scalar_select %p394, %s393, 7
        %s396 = smul.u32 128, %s395
        %p397 = scmp.lt.s32.totalorder %s392, 12
        %s398 = scalar_select %p397, %s392, 12
        %s399 = smul.addr %s398, 8
        %s400 = scalar_lea.vmem %s0, %s399
        %s401 = smul.u32 7, %s23
        %s402 = ssub.s32 13, %s401
        %p403 = scmp.lt.s32.totalorder %s402, 7
        %s404 = scalar_select %p403, %s402, 7
        %s405 = smul.u32 128, %s404
        %s406 = smul.u32 7, %s23
        %s407 = ssub.s32 13, %s406
        %p408 = scmp.lt.s32.totalorder %s407, 7
        %s409 = scalar_select %p408, %s407, 7
        %s410 = smul.u32 128, %s409
        %v411 = vld [vmem:[%s400] sm:$0xff]
        %v412 = vld [vmem:[%s400 + $0x8] sm:$0xff]
        %v413 = vld [vmem:[%s400 + $0x10] sm:$0xff]
        %v414 = vld [vmem:[%s400 + $0x18] sm:$0xff]
        %v415 = vld [vmem:[%s400 + $0x20] sm:$0xff]
        %v416 = vld [vmem:[%s400 + $0x28] sm:$0xff]
        %v417 = vld [vmem:[%s400 + $0x30] sm:$0xff]
        %v418 = vld [vmem:[#allocation2] sm:$0xff]
        %v419 = vld [vmem:[#allocation2 + $0x8] sm:$0xff]
        %v420 = vld [vmem:[%s2] sm:$0x1]
        %v422 = vlaneseq
        %v423 = vshrl.u32 %v422, 7
        %v424 = vsub.s32 0, %v423
        %v425 = vrot.slane %v420, %v424
        %vm427 = vcmask 130048
        %v429 = vsel %vm427, %v411, 0
        %v432 = vsel %vm427, %v412, 0
        %v435 = vsel %vm427, %v413, 0
        %v438 = vsel %vm427, %v414, 0
        %v441 = vsel %vm427, %v415, 0
        %v444 = vsel %vm427, %v416, 0
        %v447 = vsel %vm427, %v417, 0
        %449 = vmatprep.subr.mxu0 0.0
        %450 = vmatpush1.msra.mxu0 0.0
        %451 = vmatprep.subr.mxu0 0.0
        %452 = vmatpush1.msra.mxu0 0.0
        %453 = vmatprep.subr.mxu0 0.0
        %454 = vmatpush1.msra.mxu0 0.0
        %455 = vmatprep.subr.mxu0 0.0
        %456 = vmatpush1.msra.mxu0 0.0
        %457 = vmatprep.subr.mxu0 0.0
        %458 = vmatpush1.msra.mxu0 0.0
        %459 = vmatprep.subr.mxu0 0.0
        %460 = vmatpush1.msra.mxu0 0.0
        %461 = vmatprep.subr.mxu0 0.0
        %462 = vmatpush1.msra.mxu0 0.0
        %463 = vmatprep.subr.mxu0 0.0
        %464 = vmatpush1.msra.mxu0 0.0
        %465 = vmatprep.subr.mxu0 0.0
        %466 = vmatpush1.msra.mxu0 0.0
        %467 = vmatprep.subr.mxu0 0.0
        %468 = vmatpush1.msra.mxu0 0.0
        %469 = vmatprep.subr.mxu0 0.0
        %470 = vmatpush1.msra.mxu0 0.0
        %471 = vmatprep.subr.mxu0 0.0
        %472 = vmatpush1.msra.mxu0 0.0
        %473 = vmatprep.subr.mxu0 0.0
        %474 = vmatpush1.msra.mxu0 0.0
        %475 = vmatprep.subr.mxu0 0.0
        %476 = vmatpush1.msra.mxu0 0.0
        %477 = vmatprep.subr.mxu0 0.0
        %478 = vmatpush1.msra.mxu0 %v419
        %479 = vmatprep.subr.mxu0 0.0
        %480 = vmatpush1.msra.mxu0 %v418
        %481 = vmatprep.subr.mxu0 0.0
        %482 = vmatpush2.msra.mxu0 0.0
        %483 = vmatprep.subr.mxu0 0.0
        %484 = vmatpush2.msra.mxu0 0.0
        %485 = vmatprep.subr.mxu0 0.0
        %486 = vmatpush2.msra.mxu0 0.0
        %487 = vmatprep.subr.mxu0 0.0
        %488 = vmatpush2.msra.mxu0 0.0
        %489 = vmatprep.subr.mxu0 0.0
        %490 = vmatpush2.msra.mxu0 0.0
        %491 = vmatprep.subr.mxu0 0.0
        %492 = vmatpush2.msra.mxu0 0.0
        %493 = vmatprep.subr.mxu0 0.0
        %494 = vmatpush2.msra.mxu0 0.0
        %495 = vmatprep.subr.mxu0 0.0
        %496 = vmatpush2.msra.mxu0 0.0
        %497 = vmatprep.subr.mxu0 0.0
        %498 = vmatpush2.msra.mxu0 0.0
        %499 = vmatprep.subr.mxu0 0.0
        %500 = vmatpush2.msra.mxu0 0.0
        %501 = vmatprep.subr.mxu0 0.0
        %502 = vmatpush2.msra.mxu0 0.0
        %503 = vmatprep.subr.mxu0 0.0
        %504 = vmatpush2.msra.mxu0 0.0
        %505 = vmatprep.subr.mxu0 0.0
        %506 = vmatpush2.msra.mxu0 0.0
        %507 = vmatprep.subr.mxu0 0.0
        %508 = vmatpush2.msra.mxu0 0.0
        %509 = vmatprep.subr.mxu0 0.0
        %510 = vmatpush2.msra.mxu0 0.0
        %511 = vmatprep.subr.mxu0 0.0
        %512 = vmatpush2.msra.mxu0 0.0
        %513 = vmatprep.mubr.f32.mxu0 0.0
        %514 = vmatmul.mubr.f32.gmra.mxu0 %v429
        %v515 = vpop.f32.mrf.mxu0
        %v516 = vadd.f32 %v425, %v515
        %v517 = vpop.f32.mrf.mxu0
        %518 = vmatprep.mubr.f32.mxu0 0.0
        %519 = vmatmul.mubr.f32.gmra.mxu0 %v432
        %v520 = vpop.f32.mrf.mxu0
        %v521 = vadd.f32 %v425, %v520
        %v522 = vpop.f32.mrf.mxu0
        %523 = vmatprep.mubr.f32.mxu0 0.0
        %524 = vmatmul.mubr.f32.gmra.mxu0 %v435
        %v525 = vpop.f32.mrf.mxu0
        %v526 = vadd.f32 %v425, %v525
        %v527 = vpop.f32.mrf.mxu0
        %528 = vmatprep.mubr.f32.mxu0 0.0
        %529 = vmatmul.mubr.f32.gmra.mxu0 %v438
        %v530 = vpop.f32.mrf.mxu0
        %v531 = vadd.f32 %v425, %v530
        %v532 = vpop.f32.mrf.mxu0
        %533 = vmatprep.mubr.f32.mxu0 0.0
        %534 = vmatmul.mubr.f32.gmra.mxu0 %v441
        %v535 = vpop.f32.mrf.mxu0
        %v536 = vadd.f32 %v425, %v535
        %v537 = vpop.f32.mrf.mxu0
        %538 = vmatprep.mubr.f32.mxu0 0.0
        %539 = vmatmul.mubr.f32.gmra.mxu0 %v444
        %v540 = vpop.f32.mrf.mxu0
        %v541 = vadd.f32 %v425, %v540
        %v542 = vpop.f32.mrf.mxu0
        %543 = vmatprep.mubr.f32.mxu0 0.0
        %544 = vmatmul.mubr.f32.gmra.mxu0 %v447
        %v545 = vpop.f32.mrf.mxu0
        %v546 = vadd.f32 %v425, %v545
        %v547 = vpop.f32.mrf.mxu0
        %548 = vdwg.mxu0
        %v549 = vmax.f32 %v516, 0.0
        %v550 = vmax.f32 %v521, 0.0
        %v551 = vmax.f32 %v526, 0.0
        %v552 = vmax.f32 %v531, 0.0
        %v553 = vmax.f32 %v536, 0.0
        %v554 = vmax.f32 %v541, 0.0
        %v555 = vmax.f32 %v546, 0.0
        %v556 = vld [vmem:[#allocation4] sm:$0xff]
        %v557 = vld [vmem:[#allocation4 + $0x8] sm:$0xff]
        %v558 = vld [vmem:[#allocation4 + $0x10] sm:$0xff]
        %v559 = vld [vmem:[#allocation4 + $0x18] sm:$0xff]
        %v560 = vld [vmem:[#allocation4 + $0x20] sm:$0xff]
        %v561 = vld [vmem:[#allocation4 + $0x28] sm:$0xff]
        %v562 = vld [vmem:[#allocation4 + $0x30] sm:$0xff]
        %v563 = vld [vmem:[#allocation4 + $0x38] sm:$0xff]
        %v564 = vld [vmem:[#allocation4 + $0x40] sm:$0xff]
        %v565 = vld [vmem:[#allocation4 + $0x48] sm:$0xff]
        %v566 = vld [vmem:[#allocation4 + $0x50] sm:$0xff]
        %v567 = vld [vmem:[#allocation4 + $0x58] sm:$0xff]
        %v568 = vld [vmem:[#allocation4 + $0x60] sm:$0xff]
        %v569 = vld [vmem:[#allocation4 + $0x68] sm:$0xff]
        %v570 = vld [vmem:[#allocation4 + $0x70] sm:$0xff]
        %v571 = vld [vmem:[#allocation4 + $0x78] sm:$0xff]
        %v572 = vld [vmem:[#allocation6] sm:$0x1]
        %v574 = vlaneseq
        %v575 = vshrl.u32 %v574, 7
        %v576 = vsub.s32 0, %v575
        %v577 = vrot.slane %v572, %v576
        %579 = vmatprep.subr.mxu0 0.0
        %580 = vmatpush1.msra.mxu0 %v571
        %581 = vmatprep.subr.mxu0 0.0
        %582 = vmatpush1.msra.mxu0 %v570
        %583 = vmatprep.subr.mxu0 0.0
        %584 = vmatpush1.msra.mxu0 %v569
        %585 = vmatprep.subr.mxu0 0.0
        %586 = vmatpush1.msra.mxu0 %v568
        %587 = vmatprep.subr.mxu0 0.0
        %588 = vmatpush1.msra.mxu0 %v567
        %589 = vmatprep.subr.mxu0 0.0
        %590 = vmatpush1.msra.mxu0 %v566
        %591 = vmatprep.subr.mxu0 0.0
        %592 = vmatpush1.msra.mxu0 %v565
        %593 = vmatprep.subr.mxu0 0.0
        %594 = vmatpush1.msra.mxu0 %v564
        %595 = vmatprep.subr.mxu0 0.0
        %596 = vmatpush1.msra.mxu0 %v563
        %597 = vmatprep.subr.mxu0 0.0
        %598 = vmatpush1.msra.mxu0 %v562
        %599 = vmatprep.subr.mxu0 0.0
        %600 = vmatpush1.msra.mxu0 %v561
        %601 = vmatprep.subr.mxu0 0.0
        %602 = vmatpush1.msra.mxu0 %v560
        %603 = vmatprep.subr.mxu0 0.0
        %604 = vmatpush1.msra.mxu0 %v559
        %605 = vmatprep.subr.mxu0 0.0
        %606 = vmatpush1.msra.mxu0 %v558
        %607 = vmatprep.subr.mxu0 0.0
        %608 = vmatpush1.msra.mxu0 %v557
        %609 = vmatprep.subr.mxu0 0.0
        %610 = vmatpush1.msra.mxu0 %v556
        %611 = vmatprep.subr.mxu0 0.0
        %612 = vmatpush2.msra.mxu0 0.0
        %613 = vmatprep.subr.mxu0 0.0
        %614 = vmatpush2.msra.mxu0 0.0
        %615 = vmatprep.subr.mxu0 0.0
        %616 = vmatpush2.msra.mxu0 0.0
        %617 = vmatprep.subr.mxu0 0.0
        %618 = vmatpush2.msra.mxu0 0.0
        %619 = vmatprep.subr.mxu0 0.0
        %620 = vmatpush2.msra.mxu0 0.0
        %621 = vmatprep.subr.mxu0 0.0
        %622 = vmatpush2.msra.mxu0 0.0
        %623 = vmatprep.subr.mxu0 0.0
        %624 = vmatpush2.msra.mxu0 0.0
        %625 = vmatprep.subr.mxu0 0.0
        %626 = vmatpush2.msra.mxu0 0.0
        %627 = vmatprep.subr.mxu0 0.0
        %628 = vmatpush2.msra.mxu0 0.0
        %629 = vmatprep.subr.mxu0 0.0
        %630 = vmatpush2.msra.mxu0 0.0
        %631 = vmatprep.subr.mxu0 0.0
        %632 = vmatpush2.msra.mxu0 0.0
        %633 = vmatprep.subr.mxu0 0.0
        %634 = vmatpush2.msra.mxu0 0.0
        %635 = vmatprep.subr.mxu0 0.0
        %636 = vmatpush2.msra.mxu0 0.0
        %637 = vmatprep.subr.mxu0 0.0
        %638 = vmatpush2.msra.mxu0 0.0
        %639 = vmatprep.subr.mxu0 0.0
        %640 = vmatpush2.msra.mxu0 0.0
        %641 = vmatprep.subr.mxu0 0.0
        %642 = vmatpush2.msra.mxu0 0.0
        %643 = vmatprep.mubr.f32.mxu0 0.0
        %644 = vmatmul.mubr.f32.gmra.mxu0 %v549
        %v645 = vpop.f32.mrf.mxu0
        %v646 = vadd.f32 %v577, %v645
        %v647 = vpop.f32.mrf.mxu0
        %648 = vmatprep.mubr.f32.mxu0 0.0
        %649 = vmatmul.mubr.f32.gmra.mxu0 %v550
        %v650 = vpop.f32.mrf.mxu0
        %v651 = vadd.f32 %v577, %v650
        %v652 = vpop.f32.mrf.mxu0
        %653 = vmatprep.mubr.f32.mxu0 0.0
        %654 = vmatmul.mubr.f32.gmra.mxu0 %v551
        %v655 = vpop.f32.mrf.mxu0
        %v656 = vadd.f32 %v577, %v655
        %v657 = vpop.f32.mrf.mxu0
        %658 = vmatprep.mubr.f32.mxu0 0.0
        %659 = vmatmul.mubr.f32.gmra.mxu0 %v552
        %v660 = vpop.f32.mrf.mxu0
        %v661 = vadd.f32 %v577, %v660
        %v662 = vpop.f32.mrf.mxu0
        %663 = vmatprep.mubr.f32.mxu0 0.0
        %664 = vmatmul.mubr.f32.gmra.mxu0 %v553
        %v665 = vpop.f32.mrf.mxu0
        %v666 = vadd.f32 %v577, %v665
        %v667 = vpop.f32.mrf.mxu0
        %668 = vmatprep.mubr.f32.mxu0 0.0
        %669 = vmatmul.mubr.f32.gmra.mxu0 %v554
        %v670 = vpop.f32.mrf.mxu0
        %v671 = vadd.f32 %v577, %v670
        %v672 = vpop.f32.mrf.mxu0
        %673 = vmatprep.mubr.f32.mxu0 0.0
        %674 = vmatmul.mubr.f32.gmra.mxu0 %v555
        %v675 = vpop.f32.mrf.mxu0
        %v676 = vadd.f32 %v577, %v675
        %v677 = vpop.f32.mrf.mxu0
        %678 = vdwg.mxu0
        %v679 = vmax.f32 %v646, 0.0
        %v680 = vmax.f32 %v651, 0.0
        %v681 = vmax.f32 %v656, 0.0
        %v682 = vmax.f32 %v661, 0.0
        %v683 = vmax.f32 %v666, 0.0
        %v684 = vmax.f32 %v671, 0.0
        %v685 = vmax.f32 %v676, 0.0
        %v686 = vld [vmem:[%s5] sm:$0xff]
        %v687 = vld [vmem:[%s5 + $0x8] sm:$0xff]
        %v688 = vld [vmem:[%s5 + $0x10] sm:$0xff]
        %v689 = vld [vmem:[%s5 + $0x18] sm:$0xff]
        %v690 = vld [vmem:[%s5 + $0x20] sm:$0xff]
        %v691 = vld [vmem:[%s5 + $0x28] sm:$0xff]
        %v692 = vld [vmem:[%s5 + $0x30] sm:$0xff]
        %v693 = vld [vmem:[%s5 + $0x38] sm:$0xff]
        %v694 = vld [vmem:[%s5 + $0x40] sm:$0xff]
        %v695 = vld [vmem:[%s5 + $0x48] sm:$0xff]
        %v696 = vld [vmem:[%s5 + $0x50] sm:$0xff]
        %v697 = vld [vmem:[%s5 + $0x58] sm:$0xff]
        %v698 = vld [vmem:[%s5 + $0x60] sm:$0xff]
        %v699 = vld [vmem:[%s5 + $0x68] sm:$0xff]
        %v700 = vld [vmem:[%s5 + $0x70] sm:$0xff]
        %v701 = vld [vmem:[%s5 + $0x78] sm:$0xff]
        %v702 = vld [vmem:[%s6] sm:$0x1]
        %v704 = vlaneseq
        %v705 = vshrl.u32 %v704, 7
        %v706 = vsub.s32 0, %v705
        %v707 = vrot.slane %v702, %v706
        %709 = vmatprep.subr.mxu0 0.0
        %710 = vmatpush1.msra.mxu0 %v701
        %711 = vmatprep.subr.mxu0 0.0
        %712 = vmatpush1.msra.mxu0 %v700
        %713 = vmatprep.subr.mxu0 0.0
        %714 = vmatpush1.msra.mxu0 %v699
        %715 = vmatprep.subr.mxu0 0.0
        %716 = vmatpush1.msra.mxu0 %v698
        %717 = vmatprep.subr.mxu0 0.0
        %718 = vmatpush1.msra.mxu0 %v697
        %719 = vmatprep.subr.mxu0 0.0
        %720 = vmatpush1.msra.mxu0 %v696
        %721 = vmatprep.subr.mxu0 0.0
        %722 = vmatpush1.msra.mxu0 %v695
        %723 = vmatprep.subr.mxu0 0.0
        %724 = vmatpush1.msra.mxu0 %v694
        %725 = vmatprep.subr.mxu0 0.0
        %726 = vmatpush1.msra.mxu0 %v693
        %727 = vmatprep.subr.mxu0 0.0
        %728 = vmatpush1.msra.mxu0 %v692
        %729 = vmatprep.subr.mxu0 0.0
        %730 = vmatpush1.msra.mxu0 %v691
        %731 = vmatprep.subr.mxu0 0.0
        %732 = vmatpush1.msra.mxu0 %v690
        %733 = vmatprep.subr.mxu0 0.0
        %734 = vmatpush1.msra.mxu0 %v689
        %735 = vmatprep.subr.mxu0 0.0
        %736 = vmatpush1.msra.mxu0 %v688
        %737 = vmatprep.subr.mxu0 0.0
        %738 = vmatpush1.msra.mxu0 %v687
        %739 = vmatprep.subr.mxu0 0.0
        %740 = vmatpush1.msra.mxu0 %v686
        %741 = vmatprep.subr.mxu0 0.0
        %742 = vmatpush2.msra.mxu0 0.0
        %743 = vmatprep.subr.mxu0 0.0
        %744 = vmatpush2.msra.mxu0 0.0
        %745 = vmatprep.subr.mxu0 0.0
        %746 = vmatpush2.msra.mxu0 0.0
        %747 = vmatprep.subr.mxu0 0.0
        %748 = vmatpush2.msra.mxu0 0.0
        %749 = vmatprep.subr.mxu0 0.0
        %750 = vmatpush2.msra.mxu0 0.0
        %751 = vmatprep.subr.mxu0 0.0
        %752 = vmatpush2.msra.mxu0 0.0
        %753 = vmatprep.subr.mxu0 0.0
        %754 = vmatpush2.msra.mxu0 0.0
        %755 = vmatprep.subr.mxu0 0.0
        %756 = vmatpush2.msra.mxu0 0.0
        %757 = vmatprep.subr.mxu0 0.0
        %758 = vmatpush2.msra.mxu0 0.0
        %759 = vmatprep.subr.mxu0 0.0
        %760 = vmatpush2.msra.mxu0 0.0
        %761 = vmatprep.subr.mxu0 0.0
        %762 = vmatpush2.msra.mxu0 0.0
        %763 = vmatprep.subr.mxu0 0.0
        %764 = vmatpush2.msra.mxu0 0.0
        %765 = vmatprep.subr.mxu0 0.0
        %766 = vmatpush2.msra.mxu0 0.0
        %767 = vmatprep.subr.mxu0 0.0
        %768 = vmatpush2.msra.mxu0 0.0
        %769 = vmatprep.subr.mxu0 0.0
        %770 = vmatpush2.msra.mxu0 0.0
        %771 = vmatprep.subr.mxu0 0.0
        %772 = vmatpush2.msra.mxu0 0.0
        %773 = vmatprep.mubr.f32.mxu0 0.0
        %774 = vmatmul.mubr.f32.gmra.mxu0 %v679
        %v775 = vpop.f32.mrf.mxu0
        %v776 = vadd.f32 %v707, %v775
        %v777 = vpop.f32.mrf.mxu0
        %778 = vmatprep.mubr.f32.mxu0 0.0
        %779 = vmatmul.mubr.f32.gmra.mxu0 %v680
        %v780 = vpop.f32.mrf.mxu0
        %v781 = vadd.f32 %v707, %v780
        %v782 = vpop.f32.mrf.mxu0
        %783 = vmatprep.mubr.f32.mxu0 0.0
        %784 = vmatmul.mubr.f32.gmra.mxu0 %v681
        %v785 = vpop.f32.mrf.mxu0
        %v786 = vadd.f32 %v707, %v785
        %v787 = vpop.f32.mrf.mxu0
        %788 = vmatprep.mubr.f32.mxu0 0.0
        %789 = vmatmul.mubr.f32.gmra.mxu0 %v682
        %v790 = vpop.f32.mrf.mxu0
        %v791 = vadd.f32 %v707, %v790
        %v792 = vpop.f32.mrf.mxu0
        %793 = vmatprep.mubr.f32.mxu0 0.0
        %794 = vmatmul.mubr.f32.gmra.mxu0 %v683
        %v795 = vpop.f32.mrf.mxu0
        %v796 = vadd.f32 %v707, %v795
        %v797 = vpop.f32.mrf.mxu0
        %798 = vmatprep.mubr.f32.mxu0 0.0
        %799 = vmatmul.mubr.f32.gmra.mxu0 %v684
        %v800 = vpop.f32.mrf.mxu0
        %v801 = vadd.f32 %v707, %v800
        %v802 = vpop.f32.mrf.mxu0
        %803 = vmatprep.mubr.f32.mxu0 0.0
        %804 = vmatmul.mubr.f32.gmra.mxu0 %v685
        %v805 = vpop.f32.mrf.mxu0
        %v806 = vadd.f32 %v707, %v805
        %v807 = vpop.f32.mrf.mxu0
        %808 = vdwg.mxu0
        %v809 = vmax.f32 %v776, 0.0
        %v810 = vmax.f32 %v781, 0.0
        %v811 = vmax.f32 %v786, 0.0
        %v812 = vmax.f32 %v791, 0.0
        %v813 = vmax.f32 %v796, 0.0
        %v814 = vmax.f32 %v801, 0.0
        %v815 = vmax.f32 %v806, 0.0
        %v816 = vld [vmem:[#allocation7] sm:$0xff]
        %v817 = vld [vmem:[#allocation7 + $0x8] sm:$0xff]
        %v818 = vld [vmem:[#allocation7 + $0x10] sm:$0xff]
        %v819 = vld [vmem:[#allocation7 + $0x18] sm:$0xff]
        %v820 = vld [vmem:[#allocation7 + $0x20] sm:$0xff]
        %v821 = vld [vmem:[#allocation7 + $0x28] sm:$0xff]
        %v822 = vld [vmem:[#allocation7 + $0x30] sm:$0xff]
        %v823 = vld [vmem:[#allocation7 + $0x38] sm:$0xff]
        %v824 = vld [vmem:[#allocation7 + $0x40] sm:$0xff]
        %v825 = vld [vmem:[#allocation7 + $0x48] sm:$0xff]
        %v826 = vld [vmem:[#allocation7 + $0x50] sm:$0xff]
        %v827 = vld [vmem:[#allocation7 + $0x58] sm:$0xff]
        %v828 = vld [vmem:[#allocation7 + $0x60] sm:$0xff]
        %v829 = vld [vmem:[#allocation7 + $0x68] sm:$0xff]
        %v830 = vld [vmem:[#allocation7 + $0x70] sm:$0xff]
        %v831 = vld [vmem:[#allocation7 + $0x78] sm:$0xff]
        %v832 = vld [vmem:[%s8] sm:$0x1]
        %v834 = vlaneseq
        %v835 = vshrl.u32 %v834, 7
        %v836 = vsub.s32 0, %v835
        %v837 = vrot.slane %v832, %v836
        %839 = vmatprep.subr.mxu0 0.0
        %840 = vmatpush1.msra.mxu0 %v831
        %841 = vmatprep.subr.mxu0 0.0
        %842 = vmatpush1.msra.mxu0 %v830
        %843 = vmatprep.subr.mxu0 0.0
        %844 = vmatpush1.msra.mxu0 %v829
        %845 = vmatprep.subr.mxu0 0.0
        %846 = vmatpush1.msra.mxu0 %v828
        %847 = vmatprep.subr.mxu0 0.0
        %848 = vmatpush1.msra.mxu0 %v827
        %849 = vmatprep.subr.mxu0 0.0
        %850 = vmatpush1.msra.mxu0 %v826
        %851 = vmatprep.subr.mxu0 0.0
        %852 = vmatpush1.msra.mxu0 %v825
        %853 = vmatprep.subr.mxu0 0.0
        %854 = vmatpush1.msra.mxu0 %v824
        %855 = vmatprep.subr.mxu0 0.0
        %856 = vmatpush1.msra.mxu0 %v823
        %857 = vmatprep.subr.mxu0 0.0
        %858 = vmatpush1.msra.mxu0 %v822
        %859 = vmatprep.subr.mxu0 0.0
        %860 = vmatpush1.msra.mxu0 %v821
        %861 = vmatprep.subr.mxu0 0.0
        %862 = vmatpush1.msra.mxu0 %v820
        %863 = vmatprep.subr.mxu0 0.0
        %864 = vmatpush1.msra.mxu0 %v819
        %865 = vmatprep.subr.mxu0 0.0
        %866 = vmatpush1.msra.mxu0 %v818
        %867 = vmatprep.subr.mxu0 0.0
        %868 = vmatpush1.msra.mxu0 %v817
        %869 = vmatprep.subr.mxu0 0.0
        %870 = vmatpush1.msra.mxu0 %v816
        %871 = vmatprep.subr.mxu0 0.0
        %872 = vmatpush2.msra.mxu0 0.0
        %873 = vmatprep.subr.mxu0 0.0
        %874 = vmatpush2.msra.mxu0 0.0
        %875 = vmatprep.subr.mxu0 0.0
        %876 = vmatpush2.msra.mxu0 0.0
        %877 = vmatprep.subr.mxu0 0.0
        %878 = vmatpush2.msra.mxu0 0.0
        %879 = vmatprep.subr.mxu0 0.0
        %880 = vmatpush2.msra.mxu0 0.0
        %881 = vmatprep.subr.mxu0 0.0
        %882 = vmatpush2.msra.mxu0 0.0
        %883 = vmatprep.subr.mxu0 0.0
        %884 = vmatpush2.msra.mxu0 0.0
        %885 = vmatprep.subr.mxu0 0.0
        %886 = vmatpush2.msra.mxu0 0.0
        %887 = vmatprep.subr.mxu0 0.0
        %888 = vmatpush2.msra.mxu0 0.0
        %889 = vmatprep.subr.mxu0 0.0
        %890 = vmatpush2.msra.mxu0 0.0
        %891 = vmatprep.subr.mxu0 0.0
        %892 = vmatpush2.msra.mxu0 0.0
        %893 = vmatprep.subr.mxu0 0.0
        %894 = vmatpush2.msra.mxu0 0.0
        %895 = vmatprep.subr.mxu0 0.0
        %896 = vmatpush2.msra.mxu0 0.0
        %897 = vmatprep.subr.mxu0 0.0
        %898 = vmatpush2.msra.mxu0 0.0
        %899 = vmatprep.subr.mxu0 0.0
        %900 = vmatpush2.msra.mxu0 0.0
        %901 = vmatprep.subr.mxu0 0.0
        %902 = vmatpush2.msra.mxu0 0.0
        %903 = vmatprep.mubr.f32.mxu0 0.0
        %904 = vmatmul.mubr.f32.gmra.mxu0 %v809
        %v905 = vpop.f32.mrf.mxu0
        %v906 = vadd.f32 %v837, %v905
        %v907 = vpop.f32.mrf.mxu0
        %908 = vmatprep.mubr.f32.mxu0 0.0
        %909 = vmatmul.mubr.f32.gmra.mxu0 %v810
        %v910 = vpop.f32.mrf.mxu0
        %v911 = vadd.f32 %v837, %v910
        %v912 = vpop.f32.mrf.mxu0
        %913 = vmatprep.mubr.f32.mxu0 0.0
        %914 = vmatmul.mubr.f32.gmra.mxu0 %v811
        %v915 = vpop.f32.mrf.mxu0
        %v916 = vadd.f32 %v837, %v915
        %v917 = vpop.f32.mrf.mxu0
        %918 = vmatprep.mubr.f32.mxu0 0.0
        %919 = vmatmul.mubr.f32.gmra.mxu0 %v812
        %v920 = vpop.f32.mrf.mxu0
        %v921 = vadd.f32 %v837, %v920
        %v922 = vpop.f32.mrf.mxu0
        %923 = vmatprep.mubr.f32.mxu0 0.0
        %924 = vmatmul.mubr.f32.gmra.mxu0 %v813
        %v925 = vpop.f32.mrf.mxu0
        %v926 = vadd.f32 %v837, %v925
        %v927 = vpop.f32.mrf.mxu0
        %928 = vmatprep.mubr.f32.mxu0 0.0
        %929 = vmatmul.mubr.f32.gmra.mxu0 %v814
        %v930 = vpop.f32.mrf.mxu0
        %v931 = vadd.f32 %v837, %v930
        %v932 = vpop.f32.mrf.mxu0
        %933 = vmatprep.mubr.f32.mxu0 0.0
        %934 = vmatmul.mubr.f32.gmra.mxu0 %v815
        %v935 = vpop.f32.mrf.mxu0
        %v936 = vadd.f32 %v837, %v935
        %v937 = vpop.f32.mrf.mxu0
        %938 = vdwg.mxu0
        %vm939 = vcmask 261120
        %940 = vst.msk [vmem:[%s391] sm:$0xff] %vm939, %v906
        %941 = vst.msk [vmem:[%s391 + $0x8] sm:$0xff] %vm939, %v911
        %942 = vst.msk [vmem:[%s391 + $0x10] sm:$0xff] %vm939, %v916
        %943 = vst.msk [vmem:[%s391 + $0x18] sm:$0xff] %vm939, %v921
        %944 = vst.msk [vmem:[%s391 + $0x20] sm:$0xff] %vm939, %v926
        %945 = vst.msk [vmem:[%s391 + $0x28] sm:$0xff] %vm939, %v931
        %946 = vst.msk [vmem:[%s391 + $0x30] sm:$0xff] %vm939, %v936
        %s947 = sand.u32 %s225, 1
        %s948 = sand.u32 %s225, 1
        %s949 = smul.addr %s948, 56
        %s950 = scalar_lea.vmem [#allocation9], %s949
        // Predicated region
        $region73: #{tpu_custom_call.1} parent=55 // pred_check
          %p951 = pneg %p235
        $region74: #{tpu_custom_call.1} parent=55 // pred_check_branch
          %953 = sbr.rel (%p951) target = $region76
        $region75: #{tpu_custom_call.1} parent=55 // pred_region
          %s954 = smul.u32 7, %s23
          %s955 = ssub.s32 13, %s954
          %p956 = scmp.lt.s32.totalorder %s955, 7
          %s957 = scalar_select %p956, %s955, 7
          %s958 = smul.u32 128, %s957
          %p959 = scmp.ne.s32.totalorder 0, %s958
          %s960 = smul.addr %s954, 8
          %s961 = scalar_lea.vmem %s9, %s960
          // Predicated region
          $region77: #{tpu_custom_call.1} parent=75 // pred_check
            %p962 = pneg %p959
          $region78: #{tpu_custom_call.1} parent=75 // pred_check_branch
            %964 = sbr.rel (%p962) target = $region80
          $region79: #{tpu_custom_call.1} parent=75 // pred_region
            // Predicated region
            $region81: #{tpu_custom_call.1} parent=79 // pred_check
              _
            $region82: #{tpu_custom_call.1} parent=79 // pred_check_branch
              %966 = sbr.rel (0) target = $region84
            $region83: #{tpu_custom_call.1} parent=79 // pred_region
              // Predicated region
              $region103: #{tpu_custom_call.1} parent=83 // pred_check
                _
              $region104: #{tpu_custom_call.1} parent=83 // pred_check_branch
                %1029 = sbr.rel (0) target = $region106
              $region105: #{tpu_custom_call.1} parent=83 // pred_region
                %s1030 = sdiv.u32.pop %s957, 7
                %s1031 = srem.u32.pop %s957, 7
                // While loop
                $region107: #{tpu_custom_call.1} parent=105 // loop_pre_header
                  _
                $region108: #{tpu_custom_call.1} parent=105 // loop_header
                  %s1033 = sphi 0, %s1035
                  %p1034 = scmp.ge.s32.totalorder %s1033, %s1030
                  %s1038 = sphi 0, %s1057
                  %s1039 = sphi %s950, %s1060
                  %s1040 = sphi %s961, %s1061
                $region109: #{tpu_custom_call.1} parent=105 // loop_header_branch
                  %1037 = sbr.rel (%p1034) target = $region113
                $region110: #{tpu_custom_call.1} parent=105 // loop_body
                  %v1041 = vld [vmem:[%s1039] sm:$0xff]
                  %1042 = vst [vmem:[%s1040] sm:$0xff] %v1041
                  %v1043 = vld [vmem:[%s1039 + $0x8] sm:$0xff]
                  %1044 = vst [vmem:[%s1040 + $0x8] sm:$0xff] %v1043
                  %v1045 = vld [vmem:[%s1039 + $0x10] sm:$0xff]
                  %1046 = vst [vmem:[%s1040 + $0x10] sm:$0xff] %v1045
                  %v1047 = vld [vmem:[%s1039 + $0x18] sm:$0xff]
                  %1048 = vst [vmem:[%s1040 + $0x18] sm:$0xff] %v1047
                  %v1049 = vld [vmem:[%s1039 + $0x20] sm:$0xff]
                  %1050 = vst [vmem:[%s1040 + $0x20] sm:$0xff] %v1049
                  %v1051 = vld [vmem:[%s1039 + $0x28] sm:$0xff]
                  %1052 = vst [vmem:[%s1040 + $0x28] sm:$0xff] %v1051
                  %v1053 = vld [vmem:[%s1039 + $0x30] sm:$0xff]
                  %1054 = vst [vmem:[%s1040 + $0x30] sm:$0xff] %v1053
                  %s1055 = sadd.s32 1, %s1038
                  %p1056 = scmp.ge.s32.totalorder %s1055, %s1030
                  %s1057 = scalar_select %p1056, 0, %s1055
                  %s1058 = smul.u32 %s1057, 56
                  %s1059 = smul.u32 %s1057, 56
                  %s1060 = scalar_lea.vmem %s950, %s1058 [#allocation9]
                  %s1061 = scalar_lea.vmem %s961, %s1059
                $region111: #{tpu_custom_call.1} parent=105 // loop_footer
                  %s1035 = sadd.s32 %s1033, 1
                $region112: #{tpu_custom_call.1} parent=105 // loop_footer_branch
                  %1032 = sbr.rel target = $region108
                $region113: #{tpu_custom_call.1} parent=105 // loop_exit
                  _
                %s1062 = sdiv.u32.pop %s957, 7
                %s1063 = srem.u32.pop %s957, 7
                %s1064 = smul.u32 %s1062, 7
                %s1065 = smul.u32 8, %s1064
                %s1066 = scalar_lea.vmem %s950, %s1065 [#allocation9]
                %s1067 = smul.u32 8, %s1064
                %s1068 = scalar_lea.vmem %s961, %s1067
                // While loop
                $region114: #{tpu_custom_call.1} parent=105 // loop_pre_header
                  _
                $region115: #{tpu_custom_call.1} parent=105 // loop_header
                  %s1070 = sphi 0, %s1072
                  %p1071 = scmp.ge.s32.totalorder %s1070, %s1063
                  %s1075 = sphi 0, %s1082
                  %s1076 = sphi %s1066, %s1085
                  %s1077 = sphi %s1068, %s1086
                $region116: #{tpu_custom_call.1} parent=105 // loop_header_branch
                  %1074 = sbr.rel (%p1071) target = $region120
                $region117: #{tpu_custom_call.1} parent=105 // loop_body
                  %v1078 = vld [vmem:[%s1076] sm:$0xff]
                  %1079 = vst [vmem:[%s1077] sm:$0xff] %v1078
                  %s1080 = sadd.s32 1, %s1075
                  %p1081 = scmp.ge.s32.totalorder %s1080, %s1063
                  %s1082 = scalar_select %p1081, 0, %s1080
                  %s1083 = smul.u32 %s1082, 8
                  %s1084 = smul.u32 %s1082, 8
                  %s1085 = scalar_lea.vmem %s1066, %s1083 [#allocation9]
                  %s1086 = scalar_lea.vmem %s1068, %s1084
                $region118: #{tpu_custom_call.1} parent=105 // loop_footer
                  %s1072 = sadd.s32 %s1070, 1
                $region119: #{tpu_custom_call.1} parent=105 // loop_footer_branch
                  %1069 = sbr.rel target = $region115
                $region120: #{tpu_custom_call.1} parent=105 // loop_exit
                  _
              $region106: #{tpu_custom_call.1} parent=83 // pred_fallthru
                _
              // Predicated region
              $region121: #{tpu_custom_call.1} parent=83 // pred_check
                _
              $region122: #{tpu_custom_call.1} parent=83 // pred_check_branch
                %1088 = sbr.rel target = $region124
              $region123: #{tpu_custom_call.1} parent=83 // pred_region
                _
              $region124: #{tpu_custom_call.1} parent=83 // pred_fallthru
                _
            $region84: #{tpu_custom_call.1} parent=79 // pred_fallthru
              _
            // Predicated region
            $region85: #{tpu_custom_call.1} parent=79 // pred_check
              _
            $region86: #{tpu_custom_call.1} parent=79 // pred_check_branch
              %968 = sbr.rel target = $region88
            $region87: #{tpu_custom_call.1} parent=79 // pred_region
              %s970 = ssub.s32 256, 1
              %s971 = sdiv.u32.pop %s957, 7
              %s972 = srem.u32.pop %s957, 7
              // While loop
              $region89: #{tpu_custom_call.1} parent=87 // loop_pre_header
                _
              $region90: #{tpu_custom_call.1} parent=87 // loop_header
                %s974 = sphi 0, %s976
                %p975 = scmp.ge.s32.totalorder %s974, %s971
                %s979 = sphi 0, %s998
                %s980 = sphi %s950, %s1001
                %s981 = sphi %s961, %s1002
              $region91: #{tpu_custom_call.1} parent=87 // loop_header_branch
                %978 = sbr.rel (%p975) target = $region95
              $region92: #{tpu_custom_call.1} parent=87 // loop_body
                %v982 = vld [vmem:[%s980] sm:%s970]
                %983 = vst [vmem:[%s981] sm:%s970] %v982
                %v984 = vld [vmem:[%s980 + $0x8] sm:%s970]
                %985 = vst [vmem:[%s981 + $0x8] sm:%s970] %v984
                %v986 = vld [vmem:[%s980 + $0x10] sm:%s970]
                %987 = vst [vmem:[%s981 + $0x10] sm:%s970] %v986
                %v988 = vld [vmem:[%s980 + $0x18] sm:%s970]
                %989 = vst [vmem:[%s981 + $0x18] sm:%s970] %v988
                %v990 = vld [vmem:[%s980 + $0x20] sm:%s970]
                %991 = vst [vmem:[%s981 + $0x20] sm:%s970] %v990
                %v992 = vld [vmem:[%s980 + $0x28] sm:%s970]
                %993 = vst [vmem:[%s981 + $0x28] sm:%s970] %v992
                %v994 = vld [vmem:[%s980 + $0x30] sm:%s970]
                %995 = vst [vmem:[%s981 + $0x30] sm:%s970] %v994
                %s996 = sadd.s32 1, %s979
                %p997 = scmp.ge.s32.totalorder %s996, %s971
                %s998 = scalar_select %p997, 0, %s996
                %s999 = smul.u32 %s998, 56
                %s1000 = smul.u32 %s998, 56
                %s1001 = scalar_lea.vmem %s950, %s999 [#allocation9]
                %s1002 = scalar_lea.vmem %s961, %s1000
              $region93: #{tpu_custom_call.1} parent=87 // loop_footer
                %s976 = sadd.s32 %s974, 1
              $region94: #{tpu_custom_call.1} parent=87 // loop_footer_branch
                %973 = sbr.rel target = $region90
              $region95: #{tpu_custom_call.1} parent=87 // loop_exit
                _
              %s1003 = sdiv.u32.pop %s957, 7
              %s1004 = srem.u32.pop %s957, 7
              %s1005 = smul.u32 %s1003, 7
              %s1006 = smul.u32 8, %s1005
              %s1007 = scalar_lea.vmem %s950, %s1006 [#allocation9]
              %s1008 = smul.u32 8, %s1005
              %s1009 = scalar_lea.vmem %s961, %s1008
              // While loop
              $region96: #{tpu_custom_call.1} parent=87 // loop_pre_header
                _
              $region97: #{tpu_custom_call.1} parent=87 // loop_header
                %s1011 = sphi 0, %s1013
                %p1012 = scmp.ge.s32.totalorder %s1011, %s1004
                %s1016 = sphi 0, %s1023
                %s1017 = sphi %s1007, %s1026
                %s1018 = sphi %s1009, %s1027
              $region98: #{tpu_custom_call.1} parent=87 // loop_header_branch
                %1015 = sbr.rel (%p1012) target = $region102
              $region99: #{tpu_custom_call.1} parent=87 // loop_body
                %v1019 = vld [vmem:[%s1017] sm:%s970]
                %1020 = vst [vmem:[%s1018] sm:%s970] %v1019
                %s1021 = sadd.s32 1, %s1016
                %p1022 = scmp.ge.s32.totalorder %s1021, %s1004
                %s1023 = scalar_select %p1022, 0, %s1021
                %s1024 = smul.u32 %s1023, 8
                %s1025 = smul.u32 %s1023, 8
                %s1026 = scalar_lea.vmem %s1007, %s1024 [#allocation9]
                %s1027 = scalar_lea.vmem %s1009, %s1025
              $region100: #{tpu_custom_call.1} parent=87 // loop_footer
                %s1013 = sadd.s32 %s1011, 1
              $region101: #{tpu_custom_call.1} parent=87 // loop_footer_branch
                %1010 = sbr.rel target = $region97
              $region102: #{tpu_custom_call.1} parent=87 // loop_exit
                _
            $region88: #{tpu_custom_call.1} parent=79 // pred_fallthru
              _
          $region80: #{tpu_custom_call.1} parent=75 // pred_fallthru
            _
          %1089 = vnop
        $region76: #{tpu_custom_call.1} parent=55 // pred_fallthru
          _
      $region56: #{tpu_custom_call.1} parent=5 // pred_fallthru
        _
      %p1090 = scmp.le.s32.totalorder 2, %s18
      // Predicated region
      $region125: #{tpu_custom_call.1} parent=5 // pred_check
        %p1091 = pneg %p1090
      $region126: #{tpu_custom_call.1} parent=5 // pred_check_branch
        %1093 = sbr.rel (%p1091) target = $region128
      $region127: #{tpu_custom_call.1} parent=5 // pred_region
        %s1094 = ssub.s32 %s18, 2
        // Predicated region
        $region129: #{tpu_custom_call.1} parent=127 // pred_check
          %p1095 = pneg %p241
        $region130: #{tpu_custom_call.1} parent=127 // pred_check_branch
          %1097 = sbr.rel (%p1095) target = $region132
        $region131: #{tpu_custom_call.1} parent=127 // pred_region
          %s1098 = sand.u32 %s226, 1
          %s1099 = sand.u32 %s226, 1
          %s1100 = smul.addr %s1099, 56
          %s1101 = scalar_lea.vmem [#allocation9], %s1100
        $region132: #{tpu_custom_call.1} parent=127 // pred_fallthru
          _
      $region128: #{tpu_custom_call.1} parent=5 // pred_fallthru
        _
    $region6: #{tpu_custom_call.1} parent=1 // loop_footer
      %s22 = sadd.s32 1, %s18
    $region7: #{tpu_custom_call.1} parent=1 // loop_footer_branch
      %17 = sbr.rel target = $region3
    $region8: #{tpu_custom_call.1} parent=1 // loop_exit
      _
    %1102 = vsyncpa [#allocation3], 1
    %s1103 = scalar_lea.sflag [#allocation3], 1
    %1104 = vsyncpa %s1103, 1
    %1105 = vsyncpa [#allocation5], 1
    %1106 = vsyncpa [#allocation8], 1

// kernel: tpu_custom_call.1
$region0: #{tpu_custom_call.1}
  #allocation0 [shape = 'u32[]', space=smem, size = 0x4, offset = 0x4, fixed_abs, tag = 'smem constant byte address 0x4 - core index']
  #allocation1 [shape = 'u32[144,128]{1,0:T(1,128)}', space=vmem, size = 0x12000, scoped, tag = 'internal scratch']
  %s0 = inlined_call_operand.vmem [shape: f32[100,16], index: 0, kind: input, shape index: {}]
  %s1 = inlined_call_operand.hbm [shape: f32[16,128], index: 1, kind: input, shape index: {}]
  %s2 = inlined_call_operand.vmem [shape: f32[1,128], index: 2, kind: input, shape index: {}]
  %s3 = inlined_call_operand.hbm [shape: f32[128,128], index: 3, kind: input, shape index: {}]
  %s4 = inlined_call_operand.hbm [shape: f32[1,128], index: 4, kind: input, shape index: {}]
  %s5 = inlined_call_operand.vmem [shape: f32[128,128], index: 5, kind: input, shape index: {}]
  %s6 = inlined_call_operand.vmem [shape: f32[1,128], index: 6, kind: input, shape index: {}]
  %s7 = inlined_call_operand.hbm [shape: f32[128,128], index: 7, kind: input, shape index: {}]
  %s8 = inlined_call_operand.vmem [shape: f32[1,128], index: 8, kind: input, shape index: {}]
  %s9 = inlined_call_operand.vmem [shape: f32[100,32], index: 9, kind: output, shape index: {}]
  %s10 = sld [smem:[#allocation0]]
  $region133: #{tpu_custom_call.1} parent=0
    _
  %s12 = ssub.s32 1, %s10
  %s13 = scalar_select 0, %s12, %s10
  $region1: #{tpu_custom_call.1} parent=0
    #allocation2 [shape = 'u8[8192]{0}', space=vmem, size = 0x2000, scoped, tag = 'input window, operand 1, single buffered']
    #allocation3 [shape = 's32[2]{0}', space=sflag, size = 0x8, scoped, tag = 'scoped memory for tpu_custom_call.1']
    #allocation4 [shape = 'u8[65536]{0}', space=vmem, size = 0x10000, scoped, tag = 'input window, operand 3, single buffered']
    #allocation5 [shape = 's32[1]{0}', space=sflag, size = 0x4, scoped, tag = 'scoped memory for tpu_custom_call.1']
    #allocation6 [shape = 'u8[512]{0}', space=vmem, size = 0x400, scoped, tag = 'input window, operand 4, single buffered']
    #allocation7 [shape = 'u8[65536]{0}', space=vmem, size = 0x10000, scoped, tag = 'input window, operand 7, single buffered']
    #allocation8 [shape = 's32[1]{0}', space=sflag, size = 0x4, scoped, tag = 'scoped memory for tpu_custom_call.1']
    #allocation9 [shape = 'u8[57344]{0}', space=vmem, size = 0xe000, scoped, tag = 'output window, operand 0']
    %14 = vsyncpa [#allocation3], 0
    %15 = vsyncpa [#allocation5], 0
    %16 = vsyncpa [#allocation8], 0
    loop: start=0, step=1, limit=4
    $region2: #{tpu_custom_call.1} parent=1 // loop_pre_header
      _
    $region3: #{tpu_custom_call.1} parent=1 // loop_header
      %s18 = sphi 0, %s22
      %p19 = scmp.ge.s32.totalorder %s18, 4
      %s28 = sphi 0, %s30
      %s31 = sphi 0, %s28
      %s32 = sphi 0, %s31
      %s48 = sphi 0, %s32
      %s52 = sphi 0, %s52
      %s54 = sphi 0, %s52
      %s55 = sphi 0, %s54
      %s69 = sphi 0, %s55
      %s73 = sphi 0, %s73
      %s75 = sphi 0, %s73
      %s76 = sphi 0, %s75
      %s90 = sphi 0, %s76
      %s94 = sphi 0, %s94
      %s96 = sphi 0, %s94
      %s97 = sphi 0, %s96
      %s111 = sphi 0, %s97
      %s115 = sphi 0, %s115
      %s117 = sphi 0, %s115
      %s118 = sphi 0, %s117
      %s132 = sphi 0, %s118
      %s136 = sphi 0, %s136
      %s138 = sphi 0, %s136
      %s139 = sphi 0, %s138
      %s153 = sphi 0, %s139
      %s157 = sphi 0, %s157
      %s159 = sphi 0, %s157
      %s160 = sphi 0, %s159
      %s174 = sphi 0, %s160
      %s178 = sphi 0, %s178
      %s180 = sphi 0, %s178
      %s181 = sphi 0, %s180
      %s195 = sphi 0, %s181
      %s199 = sphi 0, %s199
      %s201 = sphi 0, %s199
      %s202 = sphi 0, %s201
      %s216 = sphi 0, %s202
      %s222 = sphi 0, %s224
      %s225 = sphi 0, %s222
      %s226 = sphi 0, %s225
      %s242 = sphi 0, %s226
    $region4: #{tpu_custom_call.1} parent=1 // loop_header_branch
      %21 = sbr.rel (%p19) target = $region8
    $region5: #{tpu_custom_call.1} parent=1 // loop_body
      %s23 = ssub.s32 %s18, 1
      %s24 = ssub.s32 %s18, 2
      %s25 = sadd.s32 %s18, 1
      %s26 = ssub.s32 %s18, %s25
      %p27 = scmp.eq.s32.totalorder %s26, 0
      %s29 = sadd.s32 %s28, 1
      %s30 = scalar_select %p27, %s28, %s29
      %p33 = pneg %p27
      %p34 = scmp.eq.s32.totalorder %s18, 1
      %p35 = por %p33, %p34
      %p36 = scmp.ne.s32.totalorder %s28, %s31
      %p37 = scmp.eq.s32.totalorder %s18, 0
      %p38 = por %p36, %p37
      %p39 = scmp.ne.s32.totalorder %s28, %s31
      %p40 = scmp.eq.s32.totalorder %s23, 1
      %p41 = por %p39, %p40
      %p42 = scmp.ne.s32.totalorder %s31, %s32
      %p43 = scmp.eq.s32.totalorder %s23, 0
      %p44 = por %p42, %p43
      %p45 = scmp.ne.s32.totalorder %s31, %s32
      %p46 = scmp.eq.s32.totalorder %s24, 1
      %p47 = por %p45, %p46
      %p49 = scmp.ne.s32.totalorder %s32, %s48
      %p50 = scmp.eq.s32.totalorder %s24, 0
      %p51 = por %p49, %p50
      %s53 = sadd.s32 %s52, 1
      %p56 = scmp.eq.s32.totalorder %s18, 1
      %p57 = scmp.ne.s32.totalorder %s52, %s54
      %p58 = scmp.eq.s32.totalorder %s18, 0
      %p59 = por %p57, %p58
      %p60 = scmp.ne.s32.totalorder %s52, %s54
      %p61 = scmp.eq.s32.totalorder %s23, 1
      %p62 = por %p60, %p61
      %p63 = scmp.ne.s32.totalorder %s54, %s55
      %p64 = scmp.eq.s32.totalorder %s23, 0
      %p65 = por %p63, %p64
      %p66 = scmp.ne.s32.totalorder %s54, %s55
      %p67 = scmp.eq.s32.totalorder %s24, 1
      %p68 = por %p66, %p67
      %p70 = scmp.ne.s32.totalorder %s55, %s69
      %p71 = scmp.eq.s32.totalorder %s24, 0
      %p72 = por %p70, %p71
      %s74 = sadd.s32 %s73, 1
      %p77 = scmp.eq.s32.totalorder %s18, 1
      %p78 = scmp.ne.s32.totalorder %s73, %s75
      %p79 = scmp.eq.s32.totalorder %s18, 0
      %p80 = por %p78, %p79
      %p81 = scmp.ne.s32.totalorder %s73, %s75
      %p82 = scmp.eq.s32.totalorder %s23, 1
      %p83 = por %p81, %p82
      %p84 = scmp.ne.s32.totalorder %s75, %s76
      %p85 = scmp.eq.s32.totalorder %s23, 0
      %p86 = por %p84, %p85
      %p87 = scmp.ne.s32.totalorder %s75, %s76
      %p88 = scmp.eq.s32.totalorder %s24, 1
      %p89 = por %p87, %p88
      %p91 = scmp.ne.s32.totalorder %s76, %s90
      %p92 = scmp.eq.s32.totalorder %s24, 0
      %p93 = por %p91, %p92
      %s95 = sadd.s32 %s94, 1
      %p98 = scmp.eq.s32.totalorder %s18, 1
      %p99 = scmp.ne.s32.totalorder %s94, %s96
      %p100 = scmp.eq.s32.totalorder %s18, 0
      %p101 = por %p99, %p100
      %p102 = scmp.ne.s32.totalorder %s94, %s96
      %p103 = scmp.eq.s32.totalorder %s23, 1
      %p104 = por %p102, %p103
      %p105 = scmp.ne.s32.totalorder %s96, %s97
      %p106 = scmp.eq.s32.totalorder %s23, 0
      %p107 = por %p105, %p106
      %p108 = scmp.ne.s32.totalorder %s96, %s97
      %p109 = scmp.eq.s32.totalorder %s24, 1
      %p110 = por %p108, %p109
      %p112 = scmp.ne.s32.totalorder %s97, %s111
      %p113 = scmp.eq.s32.totalorder %s24, 0
      %p114 = por %p112, %p113
      %s116 = sadd.s32 %s115, 1
      %p119 = scmp.eq.s32.totalorder %s18, 1
      %p120 = scmp.ne.s32.totalorder %s115, %s117
      %p121 = scmp.eq.s32.totalorder %s18, 0
      %p122 = por %p120, %p121
      %p123 = scmp.ne.s32.totalorder %s115, %s117
      %p124 = scmp.eq.s32.totalorder %s23, 1
      %p125 = por %p123, %p124
      %p126 = scmp.ne.s32.totalorder %s117, %s118
      %p127 = scmp.eq.s32.totalorder %s23, 0
      %p128 = por %p126, %p127
      %p129 = scmp.ne.s32.totalorder %s117, %s118
      %p130 = scmp.eq.s32.totalorder %s24, 1
      %p131 = por %p129, %p130
      %p133 = scmp.ne.s32.totalorder %s118, %s132
      %p134 = scmp.eq.s32.totalorder %s24, 0
      %p135 = por %p133, %p134
      %s137 = sadd.s32 %s136, 1
      %p140 = scmp.eq.s32.totalorder %s18, 1
      %p141 = scmp.ne.s32.totalorder %s136, %s138
      %p142 = scmp.eq.s32.totalorder %s18, 0
      %p143 = por %p141, %p142
      %p144 = scmp.ne.s32.totalorder %s136, %s138
      %p145 = scmp.eq.s32.totalorder %s23, 1
      %p146 = por %p144, %p145
      %p147 = scmp.ne.s32.totalorder %s138, %s139
      %p148 = scmp.eq.s32.totalorder %s23, 0
      %p149 = por %p147, %p148
      %p150 = scmp.ne.s32.totalorder %s138, %s139
      %p151 = scmp.eq.s32.totalorder %s24, 1
      %p152 = por %p150, %p151
      %p154 = scmp.ne.s32.totalorder %s139, %s153
      %p155 = scmp.eq.s32.totalorder %s24, 0
      %p156 = por %p154, %p155
      %s158 = sadd.s32 %s157, 1
      %p161 = scmp.eq.s32.totalorder %s18, 1
      %p162 = scmp.ne.s32.totalorder %s157, %s159
      %p163 = scmp.eq.s32.totalorder %s18, 0
      %p164 = por %p162, %p163
      %p165 = scmp.ne.s32.totalorder %s157, %s159
      %p166 = scmp.eq.s32.totalorder %s23, 1
      %p167 = por %p165, %p166
      %p168 = scmp.ne.s32.totalorder %s159, %s160
      %p169 = scmp.eq.s32.totalorder %s23, 0
      %p170 = por %p168, %p169
      %p171 = scmp.ne.s32.totalorder %s159, %s160
      %p172 = scmp.eq.s32.totalorder %s24, 1
      %p173 = por %p171, %p172
      %p175 = scmp.ne.s32.totalorder %s160, %s174
      %p176 = scmp.eq.s32.totalorder %s24, 0
      %p177 = por %p175, %p176
      %s179 = sadd.s32 %s178, 1
      %p182 = scmp.eq.s32.totalorder %s18, 1
      %p183 = scmp.ne.s32.totalorder %s178, %s180
      %p184 = scmp.eq.s32.totalorder %s18, 0
      %p185 = por %p183, %p184
      %p186 = scmp.ne.s32.totalorder %s178, %s180
      %p187 = scmp.eq.s32.totalorder %s23, 1
      %p188 = por %p186, %p187
      %p189 = scmp.ne.s32.totalorder %s180, %s181
      %p190 = scmp.eq.s32.totalorder %s23, 0
      %p191 = por %p189, %p190
      %p192 = scmp.ne.s32.totalorder %s180, %s181
      %p193 = scmp.eq.s32.totalorder %s24, 1
      %p194 = por %p192, %p193
      %p196 = scmp.ne.s32.totalorder %s181, %s195
      %p197 = scmp.eq.s32.totalorder %s24, 0
      %p198 = por %p196, %p197
      %s200 = sadd.s32 %s199, 1
      %p203 = scmp.eq.s32.totalorder %s18, 1
      %p204 = scmp.ne.s32.totalorder %s199, %s201
      %p205 = scmp.eq.s32.totalorder %s18, 0
      %p206 = por %p204, %p205
      %p207 = scmp.ne.s32.totalorder %s199, %s201
      %p208 = scmp.eq.s32.totalorder %s23, 1
      %p209 = por %p207, %p208
      %p210 = scmp.ne.s32.totalorder %s201, %s202
      %p211 = scmp.eq.s32.totalorder %s23, 0
      %p212 = por %p210, %p211
      %p213 = scmp.ne.s32.totalorder %s201, %s202
      %p214 = scmp.eq.s32.totalorder %s24, 1
      %p215 = por %p213, %p214
      %p217 = scmp.ne.s32.totalorder %s202, %s216
      %p218 = scmp.eq.s32.totalorder %s24, 0
      %p219 = por %p217, %p218
      %s220 = ssub.s32 %s18, %s25
      %p221 = scmp.eq.s32.totalorder %s220, 0
      %s223 = sadd.s32 %s222, 1
      %s224 = scalar_select %p221, %s222, %s223
      %p227 = pneg %p221
      %p228 = scmp.eq.s32.totalorder %s18, 1
      %p229 = por %p227, %p228
      %p230 = scmp.ne.s32.totalorder %s222, %s225
      %p231 = scmp.eq.s32.totalorder %s18, 0
      %p232 = por %p230, %p231
      %p233 = scmp.ne.s32.totalorder %s222, %s225
      %p234 = scmp.eq.s32.totalorder %s23, 1
      %p235 = por %p233, %p234
      %p236 = scmp.ne.s32.totalorder %s225, %s226
      %p237 = scmp.eq.s32.totalorder %s23, 0
      %p238 = por %p236, %p237
      %p239 = scmp.ne.s32.totalorder %s225, %s226
      %p240 = scmp.eq.s32.totalorder %s24, 1
      %p241 = por %p239, %p240
      %p243 = scmp.ne.s32.totalorder %s226, %s242
      %p244 = scmp.eq.s32.totalorder %s24, 0
      %p245 = por %p243, %p244
      %p246 = scmp.le.s32.totalorder 1, %s18
      %p247 = scmp.lt.s32.totalorder %s18, 3
      %p248 = pnand %p246, %p247
      %p249 = pneg %p248
      // Predicated region
      $region9: #{tpu_custom_call.1} parent=5 // pred_check
        _
      $region10: #{tpu_custom_call.1} parent=5 // pred_check_branch
        %251 = sbr.rel (%p248) target = $region12
      $region11: #{tpu_custom_call.1} parent=5 // pred_region
        %s252 = ssub.s32 %s18, 1
        // Predicated region
        $region13: #{tpu_custom_call.1} parent=11 // pred_check
          %p253 = pneg %p65
        $region14: #{tpu_custom_call.1} parent=11 // pred_check_branch
          %255 = sbr.rel (%p253) target = $region16
        $region15: #{tpu_custom_call.1} parent=11 // pred_region
          %s257 = ssub.s32 256, 256
          %258 = vsyncadd [#allocation3], %s257
          %s259 = sshll.u32 [#allocation2], 4
          %s260 = int_to_ptr.vmem [resolvable:$true] %s259
          %265 = dma.hbm_to_vmem [thread:$0]  %s1, 256, %s260, [#allocation3], 128, 128, 8
        $region16: #{tpu_custom_call.1} parent=11 // pred_fallthru
          _
        // Predicated region
        $region17: #{tpu_custom_call.1} parent=11 // pred_check
          %p266 = pneg %p86
        $region18: #{tpu_custom_call.1} parent=11 // pred_check_branch
          %268 = sbr.rel (%p266) target = $region20
        $region19: #{tpu_custom_call.1} parent=11 // pred_region
          _
        $region20: #{tpu_custom_call.1} parent=11 // pred_fallthru
          _
        // Predicated region
        $region21: #{tpu_custom_call.1} parent=11 // pred_check
          %p269 = pneg %p107
        $region22: #{tpu_custom_call.1} parent=11 // pred_check_branch
          %271 = sbr.rel (%p269) target = $region24
        $region23: #{tpu_custom_call.1} parent=11 // pred_region
          %s273 = ssub.s32 2048, 2048
          %274 = vsyncadd [#allocation5], %s273
          %s275 = sshll.u32 [#allocation4], 4
          %s276 = int_to_ptr.vmem [resolvable:$true] %s275
          %281 = dma.hbm_to_vmem [thread:$0]  %s3, 2048, %s276, [#allocation5], 128, 128, 8
        $region24: #{tpu_custom_call.1} parent=11 // pred_fallthru
          _
        // Predicated region
        $region25: #{tpu_custom_call.1} parent=11 // pred_check
          %p282 = pneg %p128
        $region26: #{tpu_custom_call.1} parent=11 // pred_check_branch
          %284 = sbr.rel (%p282) target = $region28
        $region27: #{tpu_custom_call.1} parent=11 // pred_region
          %s286 = ssub.s32 16, 16
          %287 = vsyncadd [#allocation5], %s286
          %s289 = sshll.u32 [#allocation6], 4
          %s290 = int_to_ptr.vmem [resolvable:$true] %s289
          %292 = dma.hbm_to_vmem [thread:$0]  %s4, 16, %s290, [#allocation5]
        $region28: #{tpu_custom_call.1} parent=11 // pred_fallthru
          _
        // Predicated region
        $region29: #{tpu_custom_call.1} parent=11 // pred_check
          %p293 = pneg %p149
        $region30: #{tpu_custom_call.1} parent=11 // pred_check_branch
          %295 = sbr.rel (%p293) target = $region32
        $region31: #{tpu_custom_call.1} parent=11 // pred_region
          _
        $region32: #{tpu_custom_call.1} parent=11 // pred_fallthru
          _
        // Predicated region
        $region33: #{tpu_custom_call.1} parent=11 // pred_check
          %p296 = pneg %p170
        $region34: #{tpu_custom_call.1} parent=11 // pred_check_branch
          %298 = sbr.rel (%p296) target = $region36
        $region35: #{tpu_custom_call.1} parent=11 // pred_region
          _
        $region36: #{tpu_custom_call.1} parent=11 // pred_fallthru
          _
        // Predicated region
        $region37: #{tpu_custom_call.1} parent=11 // pred_check
          %p299 = pneg %p191
        $region38: #{tpu_custom_call.1} parent=11 // pred_check_branch
          %301 = sbr.rel (%p299) target = $region40
        $region39: #{tpu_custom_call.1} parent=11 // pred_region
          %s303 = ssub.s32 2048, 2048
          %304 = vsyncadd [#allocation8], %s303
          %s305 = sshll.u32 [#allocation7], 4
          %s306 = int_to_ptr.vmem [resolvable:$true] %s305
          %311 = dma.hbm_to_vmem [thread:$0]  %s7, 2048, %s306, [#allocation8], 128, 128, 8
        $region40: #{tpu_custom_call.1} parent=11 // pred_fallthru
          _
        // Predicated region
        $region41: #{tpu_custom_call.1} parent=11 // pred_check
          %p312 = pneg %p212
        $region42: #{tpu_custom_call.1} parent=11 // pred_check_branch
          %314 = sbr.rel (%p312) target = $region44
        $region43: #{tpu_custom_call.1} parent=11 // pred_region
          _
        $region44: #{tpu_custom_call.1} parent=11 // pred_fallthru
          _
      $region12: #{tpu_custom_call.1} parent=5 // pred_fallthru
        _
      %p315 = scmp.lt.s32.totalorder %s18, 2
      // Predicated region
      $region45: #{tpu_custom_call.1} parent=5 // pred_check
        %p316 = pneg %p315
      $region46: #{tpu_custom_call.1} parent=5 // pred_check_branch
        %318 = sbr.rel (%p316) target = $region48
      $region47: #{tpu_custom_call.1} parent=5 // pred_region
        // Predicated region
        $region49: #{tpu_custom_call.1} parent=47 // pred_check
          %p319 = pneg %p38
        $region50: #{tpu_custom_call.1} parent=47 // pred_check_branch
          %321 = sbr.rel (%p319) target = $region52
        $region51: #{tpu_custom_call.1} parent=47 // pred_region
          %s322 = smul.u32 7, %s18
          %s323 = ssub.s32 13, %s322
          %p324 = scmp.lt.s32.totalorder %s323, 7
          %s325 = scalar_select %p324, %s323, 7
          %s326 = smul.u32 128, %s325
          %p327 = scmp.lt.s32.totalorder %s322, 12
          %s328 = scalar_select %p327, %s322, 12
          %s329 = smul.addr %s328, 8
          %s330 = scalar_lea.vmem %s0, %s329
          %s331 = smul.u32 7, %s18
          %s332 = ssub.s32 13, %s331
          %p333 = scmp.lt.s32.totalorder %s332, 7
          %s334 = scalar_select %p333, %s332, 7
          %s335 = smul.u32 128, %s334
        $region52: #{tpu_custom_call.1} parent=47 // pred_fallthru
          _
      $region48: #{tpu_custom_call.1} parent=5 // pred_fallthru
        _
      %p336 = scmp.le.s32.totalorder 1, %s18
      %p337 = scmp.lt.s32.totalorder %s18, 3
      %p338 = pnand %p336, %p337
      %p339 = pneg %p338
      // Predicated region
      $region53: #{tpu_custom_call.1} parent=5 // pred_check
        _
      $region54: #{tpu_custom_call.1} parent=5 // pred_check_branch
        %341 = sbr.rel (%p338) target = $region56
      $region55: #{tpu_custom_call.1} parent=5 // pred_region
        %s342 = ssub.s32 %s18, 1
        // Predicated region
        $region57: #{tpu_custom_call.1} parent=55 // pred_check
          %p343 = pneg %p65
        $region58: #{tpu_custom_call.1} parent=55 // pred_check_branch
          %345 = sbr.rel (%p343) target = $region60
        $region59: #{tpu_custom_call.1} parent=55 // pred_region
          %346 = dma.done [#allocation3], 256
        $region60: #{tpu_custom_call.1} parent=55 // pred_fallthru
          _
        // Predicated region
        $region61: #{tpu_custom_call.1} parent=55 // pred_check
          %p347 = pneg %p107
        $region62: #{tpu_custom_call.1} parent=55 // pred_check_branch
          %349 = sbr.rel (%p347) target = $region64
        $region63: #{tpu_custom_call.1} parent=55 // pred_region
          %350 = dma.done [#allocation5], 2048
        $region64: #{tpu_custom_call.1} parent=55 // pred_fallthru
          _
        // Predicated region
        $region65: #{tpu_custom_call.1} parent=55 // pred_check
          %p351 = pneg %p128
        $region66: #{tpu_custom_call.1} parent=55 // pred_check_branch
          %353 = sbr.rel (%p351) target = $region68
        $region67: #{tpu_custom_call.1} parent=55 // pred_region
          %354 = dma.done [#allocation5], 16
        $region68: #{tpu_custom_call.1} parent=55 // pred_fallthru
          _
        // Predicated region
        $region69: #{tpu_custom_call.1} parent=55 // pred_check
          %p355 = pneg %p191
        $region70: #{tpu_custom_call.1} parent=55 // pred_check_branch
          %357 = sbr.rel (%p355) target = $region72
        $region71: #{tpu_custom_call.1} parent=55 // pred_region
          %358 = dma.done [#allocation8], 2048
        $region72: #{tpu_custom_call.1} parent=55 // pred_fallthru
          _
        %s359 = smul.u32 7, %s23
        %s360 = ssub.s32 13, %s359
        %p361 = scmp.lt.s32.totalorder %s360, 7
        %s362 = scalar_select %p361, %s360, 7
        %s363 = smul.u32 128, %s362
        %p364 = scmp.lt.s32.totalorder %s359, 12
        %s365 = scalar_select %p364, %s359, 12
        %s366 = smul.addr %s365, 8
        %s367 = scalar_lea.vmem %s0, %s366
        %p368 = pneg %p44
        %p369 = pneg %p41
        %p370 = pneg %p65
        %p371 = pneg %p62
        %p372 = pneg %p86
        %p373 = pneg %p83
        %p374 = pneg %p107
        %p375 = pneg %p104
        %p376 = pneg %p128
        %p377 = pneg %p125
        %p378 = pneg %p149
        %p379 = pneg %p146
        %p380 = pneg %p170
        %p381 = pneg %p167
        %p382 = pneg %p191
        %p383 = pneg %p188
        %p384 = pneg %p212
        %p385 = pneg %p209
        %p386 = pneg %p238
        %p387 = pneg %p235
        %s388 = sand.u32 %s225, 1
        %s389 = sand.u32 %s225, 1
        %s390 = smul.addr %s389, 56
        %s391 = scalar_lea.vmem [#allocation9], %s390
        %s392 = smul.u32 7, %s23
        %s393 = ssub.s32 13, %s392
        %p394 = scmp.lt.s32.totalorder %s393, 7
        %s395 = scalar_select %p394, %s393, 7
        %s396 = smul.u32 128, %s395
        %p397 = scmp.lt.s32.totalorder %s392, 12
        %s398 = scalar_select %p397, %s392, 12
        %s399 = smul.addr %s398, 8
        %s400 = scalar_lea.vmem %s0, %s399
        %s401 = smul.u32 7, %s23
        %s402 = ssub.s32 13, %s401
        %p403 = scmp.lt.s32.totalorder %s402, 7
        %s404 = scalar_select %p403, %s402, 7
        %s405 = smul.u32 128, %s404
        %s406 = smul.u32 7, %s23
        %s407 = ssub.s32 13, %s406
        %p408 = scmp.lt.s32.totalorder %s407, 7
        %s409 = scalar_select %p408, %s407, 7
        %s410 = smul.u32 128, %s409
        %v411 = vld [vmem:[%s400] sm:$0xff]
        %v412 = vld [vmem:[%s400 + $0x8] sm:$0xff]
        %v413 = vld [vmem:[%s400 + $0x10] sm:$0xff]
        %v414 = vld [vmem:[%s400 + $0x18] sm:$0xff]
        %v415 = vld [vmem:[%s400 + $0x20] sm:$0xff]
        %v416 = vld [vmem:[%s400 + $0x28] sm:$0xff]
        %v417 = vld [vmem:[%s400 + $0x30] sm:$0xff]
        %v418 = vld [vmem:[#allocation2] sm:$0xff]
        %v419 = vld [vmem:[#allocation2 + $0x8] sm:$0xff]
        %v420 = vld [vmem:[%s2] sm:$0x1]
        %v422 = vlaneseq
        %v423 = vshrl.u32 %v422, 7
        %v424 = vsub.s32 0, %v423
        %v425 = vrot.slane %v420, %v424
        %vm427 = vcmask 130048
        %v429 = vsel %vm427, %v411, 0
        %v432 = vsel %vm427, %v412, 0
        %v435 = vsel %vm427, %v413, 0
        %v438 = vsel %vm427, %v414, 0
        %v441 = vsel %vm427, %v415, 0
        %v444 = vsel %vm427, %v416, 0
        %v447 = vsel %vm427, %v417, 0
        %449 = vmatprep.subr.mxu0 0.0
        %450 = vmatpush1.msra.mxu0 0.0
        %451 = vmatprep.subr.mxu0 0.0
        %452 = vmatpush1.msra.mxu0 0.0
        %453 = vmatprep.subr.mxu0 0.0
        %454 = vmatpush1.msra.mxu0 0.0
        %455 = vmatprep.subr.mxu0 0.0
        %456 = vmatpush1.msra.mxu0 0.0
        %457 = vmatprep.subr.mxu0 0.0
        %458 = vmatpush1.msra.mxu0 0.0
        %459 = vmatprep.subr.mxu0 0.0
        %460 = vmatpush1.msra.mxu0 0.0
        %461 = vmatprep.subr.mxu0 0.0
        %462 = vmatpush1.msra.mxu0 0.0
        %463 = vmatprep.subr.mxu0 0.0
        %464 = vmatpush1.msra.mxu0 0.0
        %465 = vmatprep.subr.mxu0 0.0
        %466 = vmatpush1.msra.mxu0 0.0
        %467 = vmatprep.subr.mxu0 0.0
        %468 = vmatpush1.msra.mxu0 0.0
        %469 = vmatprep.subr.mxu0 0.0
        %470 = vmatpush1.msra.mxu0 0.0
        %471 = vmatprep.subr.mxu0 0.0
        %472 = vmatpush1.msra.mxu0 0.0
        %473 = vmatprep.subr.mxu0 0.0
        %474 = vmatpush1.msra.mxu0 0.0
        %475 = vmatprep.subr.mxu0 0.0
        %476 = vmatpush1.msra.mxu0 0.0
        %477 = vmatprep.subr.mxu0 0.0
        %478 = vmatpush1.msra.mxu0 %v419
        %479 = vmatprep.subr.mxu0 0.0
        %480 = vmatpush1.msra.mxu0 %v418
        %481 = vmatprep.subr.mxu0 0.0
        %482 = vmatpush2.msra.mxu0 0.0
        %483 = vmatprep.subr.mxu0 0.0
        %484 = vmatpush2.msra.mxu0 0.0
        %485 = vmatprep.subr.mxu0 0.0
        %486 = vmatpush2.msra.mxu0 0.0
        %487 = vmatprep.subr.mxu0 0.0
        %488 = vmatpush2.msra.mxu0 0.0
        %489 = vmatprep.subr.mxu0 0.0
        %490 = vmatpush2.msra.mxu0 0.0
        %491 = vmatprep.subr.mxu0 0.0
        %492 = vmatpush2.msra.mxu0 0.0
        %493 = vmatprep.subr.mxu0 0.0
        %494 = vmatpush2.msra.mxu0 0.0
        %495 = vmatprep.subr.mxu0 0.0
        %496 = vmatpush2.msra.mxu0 0.0
        %497 = vmatprep.subr.mxu0 0.0
        %498 = vmatpush2.msra.mxu0 0.0
        %499 = vmatprep.subr.mxu0 0.0
        %500 = vmatpush2.msra.mxu0 0.0
        %501 = vmatprep.subr.mxu0 0.0
        %502 = vmatpush2.msra.mxu0 0.0
        %503 = vmatprep.subr.mxu0 0.0
        %504 = vmatpush2.msra.mxu0 0.0
        %505 = vmatprep.subr.mxu0 0.0
        %506 = vmatpush2.msra.mxu0 0.0
        %507 = vmatprep.subr.mxu0 0.0
        %508 = vmatpush2.msra.mxu0 0.0
        %509 = vmatprep.subr.mxu0 0.0
        %510 = vmatpush2.msra.mxu0 0.0
        %511 = vmatprep.subr.mxu0 0.0
        %512 = vmatpush2.msra.mxu0 0.0
        %513 = vmatprep.mubr.f32.mxu0 0.0
        %514 = vmatmul.mubr.f32.gmra.mxu0 %v429
        %v515 = vpop.f32.mrf.mxu0
        %v516 = vadd.f32 %v425, %v515
        %v517 = vpop.f32.mrf.mxu0
        %518 = vmatprep.mubr.f32.mxu0 0.0
        %519 = vmatmul.mubr.f32.gmra.mxu0 %v432
        %v520 = vpop.f32.mrf.mxu0
        %v521 = vadd.f32 %v425, %v520
        %v522 = vpop.f32.mrf.mxu0
        %523 = vmatprep.mubr.f32.mxu0 0.0
        %524 = vmatmul.mubr.f32.gmra.mxu0 %v435
        %v525 = vpop.f32.mrf.mxu0
        %v526 = vadd.f32 %v425, %v525
        %v527 = vpop.f32.mrf.mxu0
        %528 = vmatprep.mubr.f32.mxu0 0.0
        %529 = vmatmul.mubr.f32.gmra.mxu0 %v438
        %v530 = vpop.f32.mrf.mxu0
        %v531 = vadd.f32 %v425, %v530
        %v532 = vpop.f32.mrf.mxu0
        %533 = vmatprep.mubr.f32.mxu0 0.0
        %534 = vmatmul.mubr.f32.gmra.mxu0 %v441
        %v535 = vpop.f32.mrf.mxu0
        %v536 = vadd.f32 %v425, %v535
        %v537 = vpop.f32.mrf.mxu0
        %538 = vmatprep.mubr.f32.mxu0 0.0
        %539 = vmatmul.mubr.f32.gmra.mxu0 %v444
        %v540 = vpop.f32.mrf.mxu0
        %v541 = vadd.f32 %v425, %v540
        %v542 = vpop.f32.mrf.mxu0
        %543 = vmatprep.mubr.f32.mxu0 0.0
        %544 = vmatmul.mubr.f32.gmra.mxu0 %v447
        %v545 = vpop.f32.mrf.mxu0
        %v546 = vadd.f32 %v425, %v545
        %v547 = vpop.f32.mrf.mxu0
        %548 = vdwg.mxu0
        %v549 = vmax.f32 %v516, 0.0
        %v550 = vmax.f32 %v521, 0.0
        %v551 = vmax.f32 %v526, 0.0
        %v552 = vmax.f32 %v531, 0.0
        %v553 = vmax.f32 %v536, 0.0
        %v554 = vmax.f32 %v541, 0.0
        %v555 = vmax.f32 %v546, 0.0
        %v556 = vld [vmem:[#allocation4] sm:$0xff]
        %v557 = vld [vmem:[#allocation4 + $0x8] sm:$0xff]
        %v558 = vld [vmem:[#allocation4 + $0x10] sm:$0xff]
        %v559 = vld [vmem:[#allocation4 + $0x18] sm:$0xff]
        %v560 = vld [vmem:[#allocation4 + $0x20] sm:$0xff]
        %v561 = vld [vmem:[#allocation4 + $0x28] sm:$0xff]
        %v562 = vld [vmem:[#allocation4 + $0x30] sm:$0xff]
        %v563 = vld [vmem:[#allocation4 + $0x38] sm:$0xff]
        %v564 = vld [vmem:[#allocation4 + $0x40] sm:$0xff]
        %v565 = vld [vmem:[#allocation4 + $0x48] sm:$0xff]
        %v566 = vld [vmem:[#allocation4 + $0x50] sm:$0xff]
        %v567 = vld [vmem:[#allocation4 + $0x58] sm:$0xff]
        %v568 = vld [vmem:[#allocation4 + $0x60] sm:$0xff]
        %v569 = vld [vmem:[#allocation4 + $0x68] sm:$0xff]
        %v570 = vld [vmem:[#allocation4 + $0x70] sm:$0xff]
        %v571 = vld [vmem:[#allocation4 + $0x78] sm:$0xff]
        %v572 = vld [vmem:[#allocation6] sm:$0x1]
        %v574 = vlaneseq
        %v575 = vshrl.u32 %v574, 7
        %v576 = vsub.s32 0, %v575
        %v577 = vrot.slane %v572, %v576
        %579 = vmatprep.subr.mxu0 0.0
        %580 = vmatpush1.msra.mxu0 %v571
        %581 = vmatprep.subr.mxu0 0.0
        %582 = vmatpush1.msra.mxu0 %v570
        %583 = vmatprep.subr.mxu0 0.0
        %584 = vmatpush1.msra.mxu0 %v569
        %585 = vmatprep.subr.mxu0 0.0
        %586 = vmatpush1.msra.mxu0 %v568
        %587 = vmatprep.subr.mxu0 0.0
        %588 = vmatpush1.msra.mxu0 %v567
        %589 = vmatprep.subr.mxu0 0.0
        %590 = vmatpush1.msra.mxu0 %v566
        %591 = vmatprep.subr.mxu0 0.0
        %592 = vmatpush1.msra.mxu0 %v565
        %593 = vmatprep.subr.mxu0 0.0
        %594 = vmatpush1.msra.mxu0 %v564
        %595 = vmatprep.subr.mxu0 0.0
        %596 = vmatpush1.msra.mxu0 %v563
        %597 = vmatprep.subr.mxu0 0.0
        %598 = vmatpush1.msra.mxu0 %v562
        %599 = vmatprep.subr.mxu0 0.0
        %600 = vmatpush1.msra.mxu0 %v561
        %601 = vmatprep.subr.mxu0 0.0
        %602 = vmatpush1.msra.mxu0 %v560
        %603 = vmatprep.subr.mxu0 0.0
        %604 = vmatpush1.msra.mxu0 %v559
        %605 = vmatprep.subr.mxu0 0.0
        %606 = vmatpush1.msra.mxu0 %v558
        %607 = vmatprep.subr.mxu0 0.0
        %608 = vmatpush1.msra.mxu0 %v557
        %609 = vmatprep.subr.mxu0 0.0
        %610 = vmatpush1.msra.mxu0 %v556
        %611 = vmatprep.subr.mxu0 0.0
        %612 = vmatpush2.msra.mxu0 0.0
        %613 = vmatprep.subr.mxu0 0.0
        %614 = vmatpush2.msra.mxu0 0.0
        %615 = vmatprep.subr.mxu0 0.0
        %616 = vmatpush2.msra.mxu0 0.0
        %617 = vmatprep.subr.mxu0 0.0
        %618 = vmatpush2.msra.mxu0 0.0
        %619 = vmatprep.subr.mxu0 0.0
        %620 = vmatpush2.msra.mxu0 0.0
        %621 = vmatprep.subr.mxu0 0.0
        %622 = vmatpush2.msra.mxu0 0.0
        %623 = vmatprep.subr.mxu0 0.0
        %624 = vmatpush2.msra.mxu0 0.0
        %625 = vmatprep.subr.mxu0 0.0
        %626 = vmatpush2.msra.mxu0 0.0
        %627 = vmatprep.subr.mxu0 0.0
        %628 = vmatpush2.msra.mxu0 0.0
        %629 = vmatprep.subr.mxu0 0.0
        %630 = vmatpush2.msra.mxu0 0.0
        %631 = vmatprep.subr.mxu0 0.0
        %632 = vmatpush2.msra.mxu0 0.0
        %633 = vmatprep.subr.mxu0 0.0
        %634 = vmatpush2.msra.mxu0 0.0
        %635 = vmatprep.subr.mxu0 0.0
        %636 = vmatpush2.msra.mxu0 0.0
        %637 = vmatprep.subr.mxu0 0.0
        %638 = vmatpush2.msra.mxu0 0.0
        %639 = vmatprep.subr.mxu0 0.0
        %640 = vmatpush2.msra.mxu0 0.0
        %641 = vmatprep.subr.mxu0 0.0
        %642 = vmatpush2.msra.mxu0 0.0
        %643 = vmatprep.mubr.f32.mxu0 0.0
        %644 = vmatmul.mubr.f32.gmra.mxu0 %v549
        %v645 = vpop.f32.mrf.mxu0
        %v646 = vadd.f32 %v577, %v645
        %v647 = vpop.f32.mrf.mxu0
        %648 = vmatprep.mubr.f32.mxu0 0.0
        %649 = vmatmul.mubr.f32.gmra.mxu0 %v550
        %v650 = vpop.f32.mrf.mxu0
        %v651 = vadd.f32 %v577, %v650
        %v652 = vpop.f32.mrf.mxu0
        %653 = vmatprep.mubr.f32.mxu0 0.0
        %654 = vmatmul.mubr.f32.gmra.mxu0 %v551
        %v655 = vpop.f32.mrf.mxu0
        %v656 = vadd.f32 %v577, %v655
        %v657 = vpop.f32.mrf.mxu0
        %658 = vmatprep.mubr.f32.mxu0 0.0
        %659 = vmatmul.mubr.f32.gmra.mxu0 %v552
        %v660 = vpop.f32.mrf.mxu0
        %v661 = vadd.f32 %v577, %v660
        %v662 = vpop.f32.mrf.mxu0
        %663 = vmatprep.mubr.f32.mxu0 0.0
        %664 = vmatmul.mubr.f32.gmra.mxu0 %v553
        %v665 = vpop.f32.mrf.mxu0
        %v666 = vadd.f32 %v577, %v665
        %v667 = vpop.f32.mrf.mxu0
        %668 = vmatprep.mubr.f32.mxu0 0.0
        %669 = vmatmul.mubr.f32.gmra.mxu0 %v554
        %v670 = vpop.f32.mrf.mxu0
        %v671 = vadd.f32 %v577, %v670
        %v672 = vpop.f32.mrf.mxu0
        %673 = vmatprep.mubr.f32.mxu0 0.0
        %674 = vmatmul.mubr.f32.gmra.mxu0 %v555
        %v675 = vpop.f32.mrf.mxu0
        %v676 = vadd.f32 %v577, %v675
        %v677 = vpop.f32.mrf.mxu0
        %678 = vdwg.mxu0
        %v679 = vmax.f32 %v646, 0.0
        %v680 = vmax.f32 %v651, 0.0
        %v681 = vmax.f32 %v656, 0.0
        %v682 = vmax.f32 %v661, 0.0
        %v683 = vmax.f32 %v666, 0.0
        %v684 = vmax.f32 %v671, 0.0
        %v685 = vmax.f32 %v676, 0.0
        %v686 = vld [vmem:[%s5] sm:$0xff]
        %v687 = vld [vmem:[%s5 + $0x8] sm:$0xff]
        %v688 = vld [vmem:[%s5 + $0x10] sm:$0xff]
        %v689 = vld [vmem:[%s5 + $0x18] sm:$0xff]
        %v690 = vld [vmem:[%s5 + $0x20] sm:$0xff]
        %v691 = vld [vmem:[%s5 + $0x28] sm:$0xff]
        %v692 = vld [vmem:[%s5 + $0x30] sm:$0xff]
        %v693 = vld [vmem:[%s5 + $0x38] sm:$0xff]
        %v694 = vld [vmem:[%s5 + $0x40] sm:$0xff]
        %v695 = vld [vmem:[%s5 + $0x48] sm:$0xff]
        %v696 = vld [vmem:[%s5 + $0x50] sm:$0xff]
        %v697 = vld [vmem:[%s5 + $0x58] sm:$0xff]
        %v698 = vld [vmem:[%s5 + $0x60] sm:$0xff]
        %v699 = vld [vmem:[%s5 + $0x68] sm:$0xff]
        %v700 = vld [vmem:[%s5 + $0x70] sm:$0xff]
        %v701 = vld [vmem:[%s5 + $0x78] sm:$0xff]
        %v702 = vld [vmem:[%s6] sm:$0x1]
        %v704 = vlaneseq
        %v705 = vshrl.u32 %v704, 7
        %v706 = vsub.s32 0, %v705
        %v707 = vrot.slane %v702, %v706
        %709 = vmatprep.subr.mxu0 0.0
        %710 = vmatpush1.msra.mxu0 %v701
        %711 = vmatprep.subr.mxu0 0.0
        %712 = vmatpush1.msra.mxu0 %v700
        %713 = vmatprep.subr.mxu0 0.0
        %714 = vmatpush1.msra.mxu0 %v699
        %715 = vmatprep.subr.mxu0 0.0
        %716 = vmatpush1.msra.mxu0 %v698
        %717 = vmatprep.subr.mxu0 0.0
        %718 = vmatpush1.msra.mxu0 %v697
        %719 = vmatprep.subr.mxu0 0.0
        %720 = vmatpush1.msra.mxu0 %v696
        %721 = vmatprep.subr.mxu0 0.0
        %722 = vmatpush1.msra.mxu0 %v695
        %723 = vmatprep.subr.mxu0 0.0
        %724 = vmatpush1.msra.mxu0 %v694
        %725 = vmatprep.subr.mxu0 0.0
        %726 = vmatpush1.msra.mxu0 %v693
        %727 = vmatprep.subr.mxu0 0.0
        %728 = vmatpush1.msra.mxu0 %v692
        %729 = vmatprep.subr.mxu0 0.0
        %730 = vmatpush1.msra.mxu0 %v691
        %731 = vmatprep.subr.mxu0 0.0
        %732 = vmatpush1.msra.mxu0 %v690
        %733 = vmatprep.subr.mxu0 0.0
        %734 = vmatpush1.msra.mxu0 %v689
        %735 = vmatprep.subr.mxu0 0.0
        %736 = vmatpush1.msra.mxu0 %v688
        %737 = vmatprep.subr.mxu0 0.0
        %738 = vmatpush1.msra.mxu0 %v687
        %739 = vmatprep.subr.mxu0 0.0
        %740 = vmatpush1.msra.mxu0 %v686
        %741 = vmatprep.subr.mxu0 0.0
        %742 = vmatpush2.msra.mxu0 0.0
        %743 = vmatprep.subr.mxu0 0.0
        %744 = vmatpush2.msra.mxu0 0.0
        %745 = vmatprep.subr.mxu0 0.0
        %746 = vmatpush2.msra.mxu0 0.0
        %747 = vmatprep.subr.mxu0 0.0
        %748 = vmatpush2.msra.mxu0 0.0
        %749 = vmatprep.subr.mxu0 0.0
        %750 = vmatpush2.msra.mxu0 0.0
        %751 = vmatprep.subr.mxu0 0.0
        %752 = vmatpush2.msra.mxu0 0.0
        %753 = vmatprep.subr.mxu0 0.0
        %754 = vmatpush2.msra.mxu0 0.0
        %755 = vmatprep.subr.mxu0 0.0
        %756 = vmatpush2.msra.mxu0 0.0
        %757 = vmatprep.subr.mxu0 0.0
        %758 = vmatpush2.msra.mxu0 0.0
        %759 = vmatprep.subr.mxu0 0.0
        %760 = vmatpush2.msra.mxu0 0.0
        %761 = vmatprep.subr.mxu0 0.0
        %762 = vmatpush2.msra.mxu0 0.0
        %763 = vmatprep.subr.mxu0 0.0
        %764 = vmatpush2.msra.mxu0 0.0
        %765 = vmatprep.subr.mxu0 0.0
        %766 = vmatpush2.msra.mxu0 0.0
        %767 = vmatprep.subr.mxu0 0.0
        %768 = vmatpush2.msra.mxu0 0.0
        %769 = vmatprep.subr.mxu0 0.0
        %770 = vmatpush2.msra.mxu0 0.0
        %771 = vmatprep.subr.mxu0 0.0
        %772 = vmatpush2.msra.mxu0 0.0
        %773 = vmatprep.mubr.f32.mxu0 0.0
        %774 = vmatmul.mubr.f32.gmra.mxu0 %v679
        %v775 = vpop.f32.mrf.mxu0
        %v776 = vadd.f32 %v707, %v775
        %v777 = vpop.f32.mrf.mxu0
        %778 = vmatprep.mubr.f32.mxu0 0.0
        %779 = vmatmul.mubr.f32.gmra.mxu0 %v680
        %v780 = vpop.f32.mrf.mxu0
        %v781 = vadd.f32 %v707, %v780
        %v782 = vpop.f32.mrf.mxu0
        %783 = vmatprep.mubr.f32.mxu0 0.0
        %784 = vmatmul.mubr.f32.gmra.mxu0 %v681
        %v785 = vpop.f32.mrf.mxu0
        %v786 = vadd.f32 %v707, %v785
        %v787 = vpop.f32.mrf.mxu0
        %788 = vmatprep.mubr.f32.mxu0 0.0
        %789 = vmatmul.mubr.f32.gmra.mxu0 %v682
        %v790 = vpop.f32.mrf.mxu0
        %v791 = vadd.f32 %v707, %v790
        %v792 = vpop.f32.mrf.mxu0
        %793 = vmatprep.mubr.f32.mxu0 0.0
        %794 = vmatmul.mubr.f32.gmra.mxu0 %v683
        %v795 = vpop.f32.mrf.mxu0
        %v796 = vadd.f32 %v707, %v795
        %v797 = vpop.f32.mrf.mxu0
        %798 = vmatprep.mubr.f32.mxu0 0.0
        %799 = vmatmul.mubr.f32.gmra.mxu0 %v684
        %v800 = vpop.f32.mrf.mxu0
        %v801 = vadd.f32 %v707, %v800
        %v802 = vpop.f32.mrf.mxu0
        %803 = vmatprep.mubr.f32.mxu0 0.0
        %804 = vmatmul.mubr.f32.gmra.mxu0 %v685
        %v805 = vpop.f32.mrf.mxu0
        %v806 = vadd.f32 %v707, %v805
        %v807 = vpop.f32.mrf.mxu0
        %808 = vdwg.mxu0
        %v809 = vmax.f32 %v776, 0.0
        %v810 = vmax.f32 %v781, 0.0
        %v811 = vmax.f32 %v786, 0.0
        %v812 = vmax.f32 %v791, 0.0
        %v813 = vmax.f32 %v796, 0.0
        %v814 = vmax.f32 %v801, 0.0
        %v815 = vmax.f32 %v806, 0.0
        %v816 = vld [vmem:[#allocation7] sm:$0xff]
        %v817 = vld [vmem:[#allocation7 + $0x8] sm:$0xff]
        %v818 = vld [vmem:[#allocation7 + $0x10] sm:$0xff]
        %v819 = vld [vmem:[#allocation7 + $0x18] sm:$0xff]
        %v820 = vld [vmem:[#allocation7 + $0x20] sm:$0xff]
        %v821 = vld [vmem:[#allocation7 + $0x28] sm:$0xff]
        %v822 = vld [vmem:[#allocation7 + $0x30] sm:$0xff]
        %v823 = vld [vmem:[#allocation7 + $0x38] sm:$0xff]
        %v824 = vld [vmem:[#allocation7 + $0x40] sm:$0xff]
        %v825 = vld [vmem:[#allocation7 + $0x48] sm:$0xff]
        %v826 = vld [vmem:[#allocation7 + $0x50] sm:$0xff]
        %v827 = vld [vmem:[#allocation7 + $0x58] sm:$0xff]
        %v828 = vld [vmem:[#allocation7 + $0x60] sm:$0xff]
        %v829 = vld [vmem:[#allocation7 + $0x68] sm:$0xff]
        %v830 = vld [vmem:[#allocation7 + $0x70] sm:$0xff]
        %v831 = vld [vmem:[#allocation7 + $0x78] sm:$0xff]
        %v832 = vld [vmem:[%s8] sm:$0x1]
        %v834 = vlaneseq
        %v835 = vshrl.u32 %v834, 7
        %v836 = vsub.s32 0, %v835
        %v837 = vrot.slane %v832, %v836
        %839 = vmatprep.subr.mxu0 0.0
        %840 = vmatpush1.msra.mxu0 %v831
        %841 = vmatprep.subr.mxu0 0.0
        %842 = vmatpush1.msra.mxu0 %v830
        %843 = vmatprep.subr.mxu0 0.0
        %844 = vmatpush1.msra.mxu0 %v829
        %845 = vmatprep.subr.mxu0 0.0
        %846 = vmatpush1.msra.mxu0 %v828
        %847 = vmatprep.subr.mxu0 0.0
        %848 = vmatpush1.msra.mxu0 %v827
        %849 = vmatprep.subr.mxu0 0.0
        %850 = vmatpush1.msra.mxu0 %v826
        %851 = vmatprep.subr.mxu0 0.0
        %852 = vmatpush1.msra.mxu0 %v825
        %853 = vmatprep.subr.mxu0 0.0
        %854 = vmatpush1.msra.mxu0 %v824
        %855 = vmatprep.subr.mxu0 0.0
        %856 = vmatpush1.msra.mxu0 %v823
        %857 = vmatprep.subr.mxu0 0.0
        %858 = vmatpush1.msra.mxu0 %v822
        %859 = vmatprep.subr.mxu0 0.0
        %860 = vmatpush1.msra.mxu0 %v821
        %861 = vmatprep.subr.mxu0 0.0
        %862 = vmatpush1.msra.mxu0 %v820
        %863 = vmatprep.subr.mxu0 0.0
        %864 = vmatpush1.msra.mxu0 %v819
        %865 = vmatprep.subr.mxu0 0.0
        %866 = vmatpush1.msra.mxu0 %v818
        %867 = vmatprep.subr.mxu0 0.0
        %868 = vmatpush1.msra.mxu0 %v817
        %869 = vmatprep.subr.mxu0 0.0
        %870 = vmatpush1.msra.mxu0 %v816
        %871 = vmatprep.subr.mxu0 0.0
        %872 = vmatpush2.msra.mxu0 0.0
        %873 = vmatprep.subr.mxu0 0.0
        %874 = vmatpush2.msra.mxu0 0.0
        %875 = vmatprep.subr.mxu0 0.0
        %876 = vmatpush2.msra.mxu0 0.0
        %877 = vmatprep.subr.mxu0 0.0
        %878 = vmatpush2.msra.mxu0 0.0
        %879 = vmatprep.subr.mxu0 0.0
        %880 = vmatpush2.msra.mxu0 0.0
        %881 = vmatprep.subr.mxu0 0.0
        %882 = vmatpush2.msra.mxu0 0.0
        %883 = vmatprep.subr.mxu0 0.0
        %884 = vmatpush2.msra.mxu0 0.0
        %885 = vmatprep.subr.mxu0 0.0
        %886 = vmatpush2.msra.mxu0 0.0
        %887 = vmatprep.subr.mxu0 0.0
        %888 = vmatpush2.msra.mxu0 0.0
        %889 = vmatprep.subr.mxu0 0.0
        %890 = vmatpush2.msra.mxu0 0.0
        %891 = vmatprep.subr.mxu0 0.0
        %892 = vmatpush2.msra.mxu0 0.0
        %893 = vmatprep.subr.mxu0 0.0
        %894 = vmatpush2.msra.mxu0 0.0
        %895 = vmatprep.subr.mxu0 0.0
        %896 = vmatpush2.msra.mxu0 0.0
        %897 = vmatprep.subr.mxu0 0.0
        %898 = vmatpush2.msra.mxu0 0.0
        %899 = vmatprep.subr.mxu0 0.0
        %900 = vmatpush2.msra.mxu0 0.0
        %901 = vmatprep.subr.mxu0 0.0
        %902 = vmatpush2.msra.mxu0 0.0
        %903 = vmatprep.mubr.f32.mxu0 0.0
        %904 = vmatmul.mubr.f32.gmra.mxu0 %v809
        %v905 = vpop.f32.mrf.mxu0
        %v906 = vadd.f32 %v837, %v905
        %v907 = vpop.f32.mrf.mxu0
        %908 = vmatprep.mubr.f32.mxu0 0.0
        %909 = vmatmul.mubr.f32.gmra.mxu0 %v810
        %v910 = vpop.f32.mrf.mxu0
        %v911 = vadd.f32 %v837, %v910
        %v912 = vpop.f32.mrf.mxu0
        %913 = vmatprep.mubr.f32.mxu0 0.0
        %914 = vmatmul.mubr.f32.gmra.mxu0 %v811
        %v915 = vpop.f32.mrf.mxu0
        %v916 = vadd.f32 %v837, %v915
        %v917 = vpop.f32.mrf.mxu0
        %918 = vmatprep.mubr.f32.mxu0 0.0
        %919 = vmatmul.mubr.f32.gmra.mxu0 %v812
        %v920 = vpop.f32.mrf.mxu0
        %v921 = vadd.f32 %v837, %v920
        %v922 = vpop.f32.mrf.mxu0
        %923 = vmatprep.mubr.f32.mxu0 0.0
        %924 = vmatmul.mubr.f32.gmra.mxu0 %v813
        %v925 = vpop.f32.mrf.mxu0
        %v926 = vadd.f32 %v837, %v925
        %v927 = vpop.f32.mrf.mxu0
        %928 = vmatprep.mubr.f32.mxu0 0.0
        %929 = vmatmul.mubr.f32.gmra.mxu0 %v814
        %v930 = vpop.f32.mrf.mxu0
        %v931 = vadd.f32 %v837, %v930
        %v932 = vpop.f32.mrf.mxu0
        %933 = vmatprep.mubr.f32.mxu0 0.0
        %934 = vmatmul.mubr.f32.gmra.mxu0 %v815
        %v935 = vpop.f32.mrf.mxu0
        %v936 = vadd.f32 %v837, %v935
        %v937 = vpop.f32.mrf.mxu0
        %938 = vdwg.mxu0
        %vm939 = vcmask 261120
        %940 = vst.msk [vmem:[%s391] sm:$0xff] %vm939, %v906
        %941 = vst.msk [vmem:[%s391 + $0x8] sm:$0xff] %vm939, %v911
        %942 = vst.msk [vmem:[%s391 + $0x10] sm:$0xff] %vm939, %v916
        %943 = vst.msk [vmem:[%s391 + $0x18] sm:$0xff] %vm939, %v921
        %944 = vst.msk [vmem:[%s391 + $0x20] sm:$0xff] %vm939, %v926
        %945 = vst.msk [vmem:[%s391 + $0x28] sm:$0xff] %vm939, %v931
        %946 = vst.msk [vmem:[%s391 + $0x30] sm:$0xff] %vm939, %v936
        %s947 = sand.u32 %s225, 1
        %s948 = sand.u32 %s225, 1
        %s949 = smul.addr %s948, 56
        %s950 = scalar_lea.vmem [#allocation9], %s949
        // Predicated region
        $region73: #{tpu_custom_call.1} parent=55 // pred_check
          %p951 = pneg %p235
        $region74: #{tpu_custom_call.1} parent=55 // pred_check_branch
          %953 = sbr.rel (%p951) target = $region76
        $region75: #{tpu_custom_call.1} parent=55 // pred_region
          %s954 = smul.u32 7, %s23
          %s955 = ssub.s32 13, %s954
          %p956 = scmp.lt.s32.totalorder %s955, 7
          %s957 = scalar_select %p956, %s955, 7
          %s958 = smul.u32 128, %s957
          %p959 = scmp.ne.s32.totalorder 0, %s958
          %s960 = smul.addr %s954, 8
          %s961 = scalar_lea.vmem %s9, %s960
          // Predicated region
          $region77: #{tpu_custom_call.1} parent=75 // pred_check
            %p962 = pneg %p959
          $region78: #{tpu_custom_call.1} parent=75 // pred_check_branch
            %964 = sbr.rel (%p962) target = $region80
          $region79: #{tpu_custom_call.1} parent=75 // pred_region
            // Predicated region
            $region81: #{tpu_custom_call.1} parent=79 // pred_check
              _
            $region82: #{tpu_custom_call.1} parent=79 // pred_check_branch
              %966 = sbr.rel (0) target = $region84
            $region83: #{tpu_custom_call.1} parent=79 // pred_region
              // Predicated region
              $region103: #{tpu_custom_call.1} parent=83 // pred_check
                _
              $region104: #{tpu_custom_call.1} parent=83 // pred_check_branch
                %1029 = sbr.rel (0) target = $region106
              $region105: #{tpu_custom_call.1} parent=83 // pred_region
                %s1030 = sdiv.u32.pop %s957, 7
                %s1031 = srem.u32.pop %s957, 7
                // While loop
                $region107: #{tpu_custom_call.1} parent=105 // loop_pre_header
                  _
                $region108: #{tpu_custom_call.1} parent=105 // loop_header
                  %s1033 = sphi 0, %s1035
                  %p1034 = scmp.ge.s32.totalorder %s1033, %s1030
                  %s1038 = sphi 0, %s1057
                  %s1039 = sphi %s950, %s1060
                  %s1040 = sphi %s961, %s1061
                $region109: #{tpu_custom_call.1} parent=105 // loop_header_branch
                  %1037 = sbr.rel (%p1034) target = $region113
                $region110: #{tpu_custom_call.1} parent=105 // loop_body
                  %v1041 = vld [vmem:[%s1039] sm:$0xff]
                  %1042 = vst [vmem:[%s1040] sm:$0xff] %v1041
                  %v1043 = vld [vmem:[%s1039 + $0x8] sm:$0xff]
                  %1044 = vst [vmem:[%s1040 + $0x8] sm:$0xff] %v1043
                  %v1045 = vld [vmem:[%s1039 + $0x10] sm:$0xff]
                  %1046 = vst [vmem:[%s1040 + $0x10] sm:$0xff] %v1045
                  %v1047 = vld [vmem:[%s1039 + $0x18] sm:$0xff]
                  %1048 = vst [vmem:[%s1040 + $0x18] sm:$0xff] %v1047
                  %v1049 = vld [vmem:[%s1039 + $0x20] sm:$0xff]
                  %1050 = vst [vmem:[%s1040 + $0x20] sm:$0xff] %v1049
                  %v1051 = vld [vmem:[%s1039 + $0x28] sm:$0xff]
                  %1052 = vst [vmem:[%s1040 + $0x28] sm:$0xff] %v1051
                  %v1053 = vld [vmem:[%s1039 + $0x30] sm:$0xff]
                  %1054 = vst [vmem:[%s1040 + $0x30] sm:$0xff] %v1053
                  %s1055 = sadd.s32 1, %s1038
                  %p1056 = scmp.ge.s32.totalorder %s1055, %s1030
                  %s1057 = scalar_select %p1056, 0, %s1055
                  %s1058 = smul.u32 %s1057, 56
                  %s1059 = smul.u32 %s1057, 56
                  %s1060 = scalar_lea.vmem %s950, %s1058 [#allocation9]
                  %s1061 = scalar_lea.vmem %s961, %s1059
                $region111: #{tpu_custom_call.1} parent=105 // loop_footer
                  %s1035 = sadd.s32 %s1033, 1
                $region112: #{tpu_custom_call.1} parent=105 // loop_footer_branch
                  %1032 = sbr.rel target = $region108
                $region113: #{tpu_custom_call.1} parent=105 // loop_exit
                  _
                %s1062 = sdiv.u32.pop %s957, 7
                %s1063 = srem.u32.pop %s957, 7
                %s1064 = smul.u32 %s1062, 7
                %s1065 = smul.u32 8, %s1064
                %s1066 = scalar_lea.vmem %s950, %s1065 [#allocation9]
                %s1067 = smul.u32 8, %s1064
                %s1068 = scalar_lea.vmem %s961, %s1067
                // While loop
                $region114: #{tpu_custom_call.1} parent=105 // loop_pre_header
                  _
                $region115: #{tpu_custom_call.1} parent=105 // loop_header
                  %s1070 = sphi 0, %s1072
                  %p1071 = scmp.ge.s32.totalorder %s1070, %s1063
                  %s1075 = sphi 0, %s1082
                  %s1076 = sphi %s1066, %s1085
                  %s1077 = sphi %s1068, %s1086
                $region116: #{tpu_custom_call.1} parent=105 // loop_header_branch
                  %1074 = sbr.rel (%p1071) target = $region120
                $region117: #{tpu_custom_call.1} parent=105 // loop_body
                  %v1078 = vld [vmem:[%s1076] sm:$0xff]
                  %1079 = vst [vmem:[%s1077] sm:$0xff] %v1078
                  %s1080 = sadd.s32 1, %s1075
                  %p1081 = scmp.ge.s32.totalorder %s1080, %s1063
                  %s1082 = scalar_select %p1081, 0, %s1080
                  %s1083 = smul.u32 %s1082, 8
                  %s1084 = smul.u32 %s1082, 8
                  %s1085 = scalar_lea.vmem %s1066, %s1083 [#allocation9]
                  %s1086 = scalar_lea.vmem %s1068, %s1084
                $region118: #{tpu_custom_call.1} parent=105 // loop_footer
                  %s1072 = sadd.s32 %s1070, 1
                $region119: #{tpu_custom_call.1} parent=105 // loop_footer_branch
                  %1069 = sbr.rel target = $region115
                $region120: #{tpu_custom_call.1} parent=105 // loop_exit
                  _
              $region106: #{tpu_custom_call.1} parent=83 // pred_fallthru
                _
              // Predicated region
              $region121: #{tpu_custom_call.1} parent=83 // pred_check
                _
              $region122: #{tpu_custom_call.1} parent=83 // pred_check_branch
                %1088 = sbr.rel target = $region124
              $region123: #{tpu_custom_call.1} parent=83 // pred_region
                _
              $region124: #{tpu_custom_call.1} parent=83 // pred_fallthru
                _
            $region84: #{tpu_custom_call.1} parent=79 // pred_fallthru
              _
            // Predicated region
            $region85: #{tpu_custom_call.1} parent=79 // pred_check
              _
            $region86: #{tpu_custom_call.1} parent=79 // pred_check_branch
              %968 = sbr.rel target = $region88
            $region87: #{tpu_custom_call.1} parent=79 // pred_region
              %s970 = ssub.s32 256, 1
              %s971 = sdiv.u32.pop %s957, 7
              %s972 = srem.u32.pop %s957, 7
              // While loop
              $region89: #{tpu_custom_call.1} parent=87 // loop_pre_header
                _
              $region90: #{tpu_custom_call.1} parent=87 // loop_header
                %s974 = sphi 0, %s976
                %p975 = scmp.ge.s32.totalorder %s974, %s971
                %s979 = sphi 0, %s998
                %s980 = sphi %s950, %s1001
                %s981 = sphi %s961, %s1002
              $region91: #{tpu_custom_call.1} parent=87 // loop_header_branch
                %978 = sbr.rel (%p975) target = $region95
              $region92: #{tpu_custom_call.1} parent=87 // loop_body
                %v982 = vld [vmem:[%s980] sm:%s970]
                %983 = vst [vmem:[%s981] sm:%s970] %v982
                %v984 = vld [vmem:[%s980 + $0x8] sm:%s970]
                %985 = vst [vmem:[%s981 + $0x8] sm:%s970] %v984
                %v986 = vld [vmem:[%s980 + $0x10] sm:%s970]
                %987 = vst [vmem:[%s981 + $0x10] sm:%s970] %v986
                %v988 = vld [vmem:[%s980 + $0x18] sm:%s970]
                %989 = vst [vmem:[%s981 + $0x18] sm:%s970] %v988
                %v990 = vld [vmem:[%s980 + $0x20] sm:%s970]
                %991 = vst [vmem:[%s981 + $0x20] sm:%s970] %v990
                %v992 = vld [vmem:[%s980 + $0x28] sm:%s970]
                %993 = vst [vmem:[%s981 + $0x28] sm:%s970] %v992
                %v994 = vld [vmem:[%s980 + $0x30] sm:%s970]
                %995 = vst [vmem:[%s981 + $0x30] sm:%s970] %v994
                %s996 = sadd.s32 1, %s979
                %p997 = scmp.ge.s32.totalorder %s996, %s971
                %s998 = scalar_select %p997, 0, %s996
                %s999 = smul.u32 %s998, 56
                %s1000 = smul.u32 %s998, 56
                %s1001 = scalar_lea.vmem %s950, %s999 [#allocation9]
                %s1002 = scalar_lea.vmem %s961, %s1000
              $region93: #{tpu_custom_call.1} parent=87 // loop_footer
                %s976 = sadd.s32 %s974, 1
              $region94: #{tpu_custom_call.1} parent=87 // loop_footer_branch
                %973 = sbr.rel target = $region90
              $region95: #{tpu_custom_call.1} parent=87 // loop_exit
                _
              %s1003 = sdiv.u32.pop %s957, 7
              %s1004 = srem.u32.pop %s957, 7
              %s1005 = smul.u32 %s1003, 7
              %s1006 = smul.u32 8, %s1005
              %s1007 = scalar_lea.vmem %s950, %s1006 [#allocation9]
              %s1008 = smul.u32 8, %s1005
              %s1009 = scalar_lea.vmem %s961, %s1008
              // While loop
              $region96: #{tpu_custom_call.1} parent=87 // loop_pre_header
                _
              $region97: #{tpu_custom_call.1} parent=87 // loop_header
                %s1011 = sphi 0, %s1013
                %p1012 = scmp.ge.s32.totalorder %s1011, %s1004
                %s1016 = sphi 0, %s1023
                %s1017 = sphi %s1007, %s1026
                %s1018 = sphi %s1009, %s1027
              $region98: #{tpu_custom_call.1} parent=87 // loop_header_branch
                %1015 = sbr.rel (%p1012) target = $region102
              $region99: #{tpu_custom_call.1} parent=87 // loop_body
                %v1019 = vld [vmem:[%s1017] sm:%s970]
                %1020 = vst [vmem:[%s1018] sm:%s970] %v1019
                %s1021 = sadd.s32 1, %s1016
                %p1022 = scmp.ge.s32.totalorder %s1021, %s1004
                %s1023 = scalar_select %p1022, 0, %s1021
                %s1024 = smul.u32 %s1023, 8
                %s1025 = smul.u32 %s1023, 8
                %s1026 = scalar_lea.vmem %s1007, %s1024 [#allocation9]
                %s1027 = scalar_lea.vmem %s1009, %s1025
              $region100: #{tpu_custom_call.1} parent=87 // loop_footer
                %s1013 = sadd.s32 %s1011, 1
              $region101: #{tpu_custom_call.1} parent=87 // loop_footer_branch
                %1010 = sbr.rel target = $region97
              $region102: #{tpu_custom_call.1} parent=87 // loop_exit
                _
            $region88: #{tpu_custom_call.1} parent=79 // pred_fallthru
              _
          $region80: #{tpu_custom_call.1} parent=75 // pred_fallthru
            _
          %1089 = vnop
        $region76: #{tpu_custom_call.1} parent=55 // pred_fallthru
          _
      $region56: #{tpu_custom_call.1} parent=5 // pred_fallthru
        _
      %p1090 = scmp.le.s32.totalorder 2, %s18
      // Predicated region
      $region125: #{tpu_custom_call.1} parent=5 // pred_check
        %p1091 = pneg %p1090
      $region126: #{tpu_custom_call.1} parent=5 // pred_check_branch
        %1093 = sbr.rel (%p1091) target = $region128
      $region127: #{tpu_custom_call.1} parent=5 // pred_region
        %s1094 = ssub.s32 %s18, 2
        // Predicated region
        $region129: #{tpu_custom_call.1} parent=127 // pred_check
          %p1095 = pneg %p241
        $region130: #{tpu_custom_call.1} parent=127 // pred_check_branch
          %1097 = sbr.rel (%p1095) target = $region132
        $region131: #{tpu_custom_call.1} parent=127 // pred_region
          %s1098 = sand.u32 %s226, 1
          %s1099 = sand.u32 %s226, 1
          %s1100 = smul.addr %s1099, 56
          %s1101 = scalar_lea.vmem [#allocation9], %s1100
        $region132: #{tpu_custom_call.1} parent=127 // pred_fallthru
          _
      $region128: #{tpu_custom_call.1} parent=5 // pred_fallthru
        _
    $region6: #{tpu_custom_call.1} parent=1 // loop_footer
      %s22 = sadd.s32 1, %s18
    $region7: #{tpu_custom_call.1} parent=1 // loop_footer_branch
      %17 = sbr.rel target = $region3
    $region8: #{tpu_custom_call.1} parent=1 // loop_exit
      _
    %1102 = vsyncpa [#allocation3], 1
    %s1103 = scalar_lea.sflag [#allocation3], 1
    %1104 = vsyncpa %s1103, 1
    %1105 = vsyncpa [#allocation5], 1
    %1106 = vsyncpa [#allocation8], 1

</llo_original>
